<compile_context>
chip_gen: v5e
topology: v5e:2x2
jax: 0.10.0
libtpu: 0.0.40
codegen_flags: <defaults>
</compile_context>

<pallas_src>
import jax
import jax.numpy as jnp
from jax.experimental import pallas as pl
from jax.experimental.pallas import tpu as pltpu

# ----------------------------- hyper-parameters ------------------------------
BATCH = 2                    # batch_size (also the LSTM "sequence length" per frame)
MELS = 8                     # AudioHyperParams.NUMBER_OF_MEL_BANDS  (LSTM input size)
TIME = 8                     # time frames iterated in the forward loop
EMB = 16                     # AudioHyperParams.EMBENDING_DIM
HID = EMB // 2               # LSTM hidden size per direction
MEL_SAMPLES = BATCH * TIME   # AudioHyperParams.MEL_SAMPLES (in_features of BiLSTM_proj)
NFRAMES = 4                  # VideoHyperParams.NUMBER_OF_FRAMES (out_features of BiLSTM_proj)

D2 = 2 * HID                 # per-layer [fw | bw] state width (== EMB == 16)
S = 2 * D2                   # fused (layer0 + layer1) state width (== 32)
GW = 4 * S                   # fused gate width (== 128 == one full f32 vreg lane row)

# ------------- packed weight-slab row offsets (all 8-row aligned) -------------
R_WIH0 = 0                   # (MELS, 128) layer-0 input weights
R_WHH = 8                    # (32, 128)  block-diagonal fused recurrent weights
R_WIH1 = 40                  # (16, 128)  layer-1 input weights
R_BIAS = 56                  # (1, 128)   fused gate bias (b_ih + b_hh, 0.5-folded)
R_WP = 64                    # (16, 128)  projection weights (zero-padded past NFRAMES)
R_BP = 80                    # (1, 128)   projection bias   (zero-padded past NFRAMES)
SLAB_ROWS = 88


# ----------------------------- fused Pallas kernel ----------------------------
def audio_encoder_kernel(x_ref, w_ref, out_ref):
    # Lane masks (computed once, whole kernel).
    lane = jax.lax.broadcasted_iota(jnp.int32, (1, GW), 1)
    lane32 = lane % S
    m_l0_nat = lane32 < HID                 # layer-0 fw columns take the natural row
    m_l1_nat = lane32 < 3 * HID             # everything except layer-1 bw takes natural
    m_g = (lane >= 2 * S) & (lane < 3 * S)  # 'g' gate lanes keep raw tanh

    lane16 = jax.lax.broadcasted_iota(jnp.int32, (1, D2), 1)
    m_fw_half = lane16 < HID                # fw half of a per-layer [fw|bw] output row

    lane_s = jax.lax.broadcasted_iota(jnp.int32, (1, S), 1)
    m_state_l0 = lane_s < D2                # layer-0 lanes of the fused state

    # Static slices of the packed weight slab.
    wih0 = w_ref[R_WIH0:R_WIH0 + MELS, :]          # (MELS, 128)
    whh = w_ref[R_WHH:R_WHH + S, :]                # (32, 128)
    wih1 = w_ref[R_WIH1:R_WIH1 + D2, :]            # (16, 128)
    bias = w_ref[R_BIAS:R_BIAS + 1, :]             # (1, 128)
    wpt = w_ref[R_WP:R_WP + MEL_SAMPLES, :]        # (16, 128)
    bp = w_ref[R_BP:R_BP + 1, :]                   # (1, 128)

    # Layer-0 input projection (+ full packed bias) for ALL frames in one dot.
    xp0 = jnp.dot(x_ref[...], wih0, preferred_element_type=jnp.float32) + bias  # (T*B, 128)

    def fused_step(xin, h, c):
        """One fused recurrent step: layer-0(frame u) + layer-1(frame u-1) together.
        xin: (1, 128) input projections (+bias).  h, c: (1, 32) fused states."""
        gates = xin + jnp.dot(h, whh, preferred_element_type=jnp.float32)   # (1, 128)
        t = jnp.tanh(gates)                                                 # single EUP op
        act = jnp.where(m_g, t, 0.5 * t + 0.5)       # sigmoid(x) = 0.5*tanh(x/2)+0.5
        i_g = act[:, 0 * S:1 * S]
        f_g = act[:, 1 * S:2 * S]
        g_g = act[:, 2 * S:3 * S]
        o_g = act[:, 3 * S:4 * S]
        c = f_g * c + i_g * g_g
        h = o_g * jnp.tanh(c)
        return h, c

    zero_state = jnp.zeros((1, S), jnp.float32)
    zero_row = jnp.zeros((1, GW), jnp.float32)
    h, c = zero_state, zero_state
    xin1 = [zero_row, zero_row]     # layer-1 inputs for the current super-step
    frame_outs = []

    # Super-step u: layer-0 processes frame u (u < TIME), layer-1 processes frame u-1.
    for u in range(TIME + 1):
        if u < TIME:
            ra = xp0[u * BATCH + 0:u * BATCH + 1, :]
            rb = xp0[u * BATCH + 1:u * BATCH + 2, :]
            # fw columns take the natural row, bw columns the swapped row (done once
            # per frame, off the recurrent chain).
            xin0 = [jnp.where(m_l0_nat, ra, rb), jnp.where(m_l0_nat, rb, ra)]
        else:
            xin0 = [bias, bias]     # epilogue: only layer-1 columns are used

        h_steps = []
        for s in range(BATCH):
            h, c = fused_step(xin0[s] + xin1[s], h, c)
            h_steps.append(h)

        if u >= 1:
            # Layer-1 output rows for frame u-1:
            # row p = [fw half from step p | bw half from step B-1-p]
            rows = []
            for p_row in range(BATCH):
                hp = h_steps[p_row][:, D2:S]
                hq = h_steps[BATCH - 1 - p_row][:, D2:S]
                rows.append(jnp.where(m_fw_half, hp, hq))
            frame_outs.append(jnp.concatenate(rows, axis=0))          # (B, EMB)

        if u == 0:
            # Layer-1 lanes were advanced with garbage (bias-only) input in the
            # prologue: reset them to the true initial zeros.
            h = jnp.where(m_state_l0, h, 0.0)
            c = jnp.where(m_state_l0, c, 0.0)

        if u < TIME:
            # Layer-0 output rows for frame u -> layer-1 input projection for the
            # next super-step (one dot per frame, off the per-step chain).
            rows0 = []
            for p_row in range(BATCH):
                hp = h_steps[p_row][:, 0:D2]
                hq = h_steps[BATCH - 1 - p_row][:, 0:D2]
                rows0.append(jnp.where(m_fw_half, hp, hq))
            l0_frame = jnp.concatenate(rows0, axis=0)                 # (B, 2H)
            xp1 = jnp.dot(l0_frame, wih1, preferred_element_type=jnp.float32)  # (B, 128)
            r1a = xp1[0:1, :]
            r1b = xp1[1:2, :]
            xin1 = [jnp.where(m_l1_nat, r1a, r1b), jnp.where(m_l1_nat, r1b, r1a)]

    res = jnp.concatenate(frame_outs, axis=0)                          # (T*B, EMB)
    # Fused projection: out[e, f] = sum_s res[s, e] * Wp[f, s] + bp[f]
    proj = jax.lax.dot_general(res, wpt,
                               dimension_numbers=(((0,), (0,)), ((), ())),
                               preferred_element_type=jnp.float32)     # (EMB, 128)
    out_ref[...] = (proj + bp)[:, 0:NFRAMES]


# ----------------------------- weight packing ----------------------------------
def pack_weight_slab(p):
    """Pack everything into one (SLAB_ROWS, 128) f32 slab.

    Gate columns are gate-major [i | f | g | o] (32 lanes each); within each gate
    block the 4 direction sub-blocks are [l0f | l0b | l1f | l1b] (8 lanes each),
    matching the fused state layout.  i/f/o columns (weights AND bias) are scaled
    by 0.5 so that sigmoid(x) == 0.5*tanh(packed_gate)+0.5 inside the kernel."""
    slab = jnp.zeros((SLAB_ROWS, GW), jnp.float32)
    gate_scale = (0.5, 0.5, 1.0, 0.5)               # i, f, g, o
    dir_keys = ('l0f', 'l0b', 'l1f', 'l1b')
    for d, key in enumerate(dir_keys):
        wih = p[f'wih_{key}']                       # (4H, in)
        whh = p[f'whh_{key}']                       # (4H, H)
        b = p[f'bih_{key}'] + p[f'bhh_{key}']       # (4H,)
        ih_row0 = R_WIH0 if d < 2 else R_WIH1
        in_dim = wih.shape[1]
        for g in range(4):
            sc = gate_scale[g]
            c0 = g * S + d * HID
            rows = slice(g * HID, (g + 1) * HID)
            slab = slab.at[ih_row0:ih_row0 + in_dim, c0:c0 + HID].set(wih[rows, :].T * sc)
            slab = slab.at[R_WHH + d * HID:R_WHH + (d + 1) * HID,
                           c0:c0 + HID].set(whh[rows, :].T * sc)
            slab = slab.at[R_BIAS, c0:c0 + HID].set(b[rows] * sc)
    slab = slab.at[R_WP:R_WP + MEL_SAMPLES, 0:NFRAMES].set(p['wp'].T)
    slab = slab.at[R_BP, 0:NFRAMES].set(p['bp'])
    return slab


def _full_spec(shape):
    return pl.BlockSpec(shape, lambda i: (0,) * len(shape))


# ----------------------------- wrapper ------------------------------------------
def audio_encoder_forward(spec, params):
    B, M, T = spec.shape
    assert (B, M, T) == (BATCH, MELS, TIME)
    assert T * B == MEL_SAMPLES

    # row t*B + p corresponds to (frame t, sequence element p)
    x_all = jnp.transpose(spec, (2, 0, 1)).reshape(TIME * BATCH, MELS)
    wslab = pack_weight_slab(params)

    out = pl.pallas_call(
        audio_encoder_kernel,
        out_shape=jax.ShapeDtypeStruct((EMB, NFRAMES), jnp.float32),
        grid=(1,),
        in_specs=[_full_spec(x_all.shape), _full_spec(wslab.shape)],
        out_specs=_full_spec((EMB, NFRAMES)),
        compiler_params=pltpu.CompilerParams(dimension_semantics=("arbitrary",)),
    )(x_all, wslab)

    # TODO(synk): nn.Dropout(0.5) is applied as identity (eval mode); training-mode
    # random masking/scaling is not reproduced.
    return out


# ----------------------------- pure-JAX reference -----------------------------
def reference_forward(spec, p):
    h = {k: jnp.zeros((HID,), jnp.float32) for k in range(4)}
    c = {k: jnp.zeros((HID,), jnp.float32) for k in range(4)}

    def run(inp, idx, wih, whh, bih, bhh, reverse):
        hh, cc = h[idx], c[idx]
        outs = [None] * inp.shape[0]
        order = range(inp.shape[0] - 1, -1, -1) if reverse else range(inp.shape[0])
        for q in order:
            g = inp[q] @ wih.T + bih + hh @ whh.T + bhh
            i_g = jax.nn.sigmoid(g[0:HID]); f_g = jax.nn.sigmoid(g[HID:2 * HID])
            g_g = jnp.tanh(g[2 * HID:3 * HID]); o_g = jax.nn.sigmoid(g[3 * HID:4 * HID])
            cc = f_g * cc + i_g * g_g
            hh = o_g * jnp.tanh(cc)
            outs[q] = hh
        h[idx], c[idx] = hh, cc
        return jnp.stack(outs, 0)

    rows = []
    for t in range(TIME):
        x = spec[:, :, t]                              # (B, MELS)
        f0 = run(x, 0, p['wih_l0f'], p['whh_l0f'], p['bih_l0f'], p['bhh_l0f'], False)
        b0 = run(x, 1, p['wih_l0b'], p['whh_l0b'], p['bih_l0b'], p['bhh_l0b'], True)
        l0 = jnp.concatenate([f0, b0], axis=1)
        f1 = run(l0, 2, p['wih_l1f'], p['whh_l1f'], p['bih_l1f'], p['bhh_l1f'], False)
        b1 = run(l0, 3, p['wih_l1b'], p['whh_l1b'], p['bih_l1b'], p['bhh_l1b'], True)
        rows.append(jnp.concatenate([f1, b1], axis=1))
    res = jnp.concatenate(rows, axis=0).T              # (EMB, MEL_SAMPLES)
    return res @ p['wp'].T + p['bp']                   # (EMB, NFRAMES)


# ----------------------------- params ------------------------------------------
def init_params(key):
    ks = iter(jax.random.split(key, 20))
    s = HID ** -0.5
    p = {}
    for name, in_dim in (('l0f', MELS), ('l0b', MELS), ('l1f', 2 * HID), ('l1b', 2 * HID)):
        p[f'wih_{name}'] = jax.random.uniform(next(ks), (4 * HID, in_dim), jnp.float32, -s, s)
        p[f'whh_{name}'] = jax.random.uniform(next(ks), (4 * HID, HID), jnp.float32, -s, s)
        p[f'bih_{name}'] = jax.random.uniform(next(ks), (4 * HID,), jnp.float32, -s, s)
        p[f'bhh_{name}'] = jax.random.uniform(next(ks), (4 * HID,), jnp.float32, -s, s)
    sp = MEL_SAMPLES ** -0.5
    p['wp'] = jax.random.uniform(next(ks), (NFRAMES, MEL_SAMPLES), jnp.float32, -sp, sp)
    p['bp'] = jax.random.uniform(next(ks), (NFRAMES,), jnp.float32, -sp, sp)
    return p


if __name__ == "__main__":
    key = jax.random.PRNGKey(0)
    pkey, xkey = jax.random.split(key)
    params = init_params(pkey)
    spec = jax.random.normal(xkey, (BATCH, MELS, TIME), jnp.float32)

    out = audio_encoder_forward(spec, params)
    out = jax.block_until_ready(out)

    ref = reference_forward(spec, params)
    assert out.shape == (EMB, NFRAMES)
    assert jnp.allclose(out, ref, atol=1e-3, rtol=1e-3), float(jnp.max(jnp.abs(out - ref)))
    print("KERNEL_OK")
</pallas_src>

<mosaic_0001>
module attributes {stable_mosaic.version = 11 : i64} {
  func.func @audio_encoder_kernel(%arg0: i32, %arg1: memref<16x8xf32, #tpu.memory_space<vmem>>, %arg2: memref<88x128xf32, #tpu.memory_space<vmem>>, %arg3: memref<16x4xf32, #tpu.memory_space<vmem>>) attributes {dimension_semantics = [#tpu.dimension_semantics<arbitrary>], iteration_bounds = array<i64: 1>, scalar_prefetch = 0 : i64, scratch_operands = 0 : i64, tpu.core_type = #tpu.core_type<tc>, window_params = [{pipeline_mode = #tpu.pipeline_mode<synchronous>, transform_indices = @transform_0, window_bounds = array<i64: 16, 8>}, {pipeline_mode = #tpu.pipeline_mode<synchronous>, transform_indices = @transform_1, window_bounds = array<i64: 88, 128>}, {pipeline_mode = #tpu.pipeline_mode<synchronous>, transform_indices = @transform_2, window_bounds = array<i64: 16, 4>}]} {
    %0 = tpu.iota {dimensions = array<i32: 1>} : vector<1x128xi32>
    %c32_i32 = arith.constant 32 : i32
    %c0_i32 = arith.constant 0 : i32
    %1 = arith.cmpi eq, %c32_i32, %c0_i32 : i32
    %c1_i32 = arith.constant 1 : i32
    %2 = arith.select %1, %c1_i32, %c32_i32 : i32
    %3 = vector.broadcast %2 : i32 to vector<1x128xi32>
    %4 = arith.remsi %0, %3 : vector<1x128xi32>
    %c0_i32_0 = arith.constant 0 : i32
    %5 = vector.broadcast %c0_i32_0 : i32 to vector<1x128xi32>
    %6 = arith.cmpi ne, %4, %5 : vector<1x128xi32>
    %c0_i32_1 = arith.constant 0 : i32
    %7 = vector.broadcast %c0_i32_1 : i32 to vector<1x128xi32>
    %8 = arith.cmpi slt, %4, %7 : vector<1x128xi32>
    %c0_i32_2 = arith.constant 0 : i32
    %9 = arith.cmpi slt, %2, %c0_i32_2 : i32
    %10 = vector.broadcast %9 : i1 to vector<1x128xi1>
    %11 = vector.broadcast %10 : vector<1x128xi1> to vector<1x128xi1>
    %12 = arith.xori %8, %11 : vector<1x128xi1>
    %13 = arith.andi %12, %6 : vector<1x128xi1>
    %14 = vector.broadcast %2 : i32 to vector<1x128xi32>
    %15 = arith.addi %4, %14 : vector<1x128xi32>
    %16 = arith.select %13, %15, %4 : vector<1x128xi1>, vector<1x128xi32>
    %c8_i32 = arith.constant 8 : i32
    %17 = vector.broadcast %c8_i32 : i32 to vector<1x128xi32>
    %18 = arith.cmpi slt, %16, %17 : vector<1x128xi32>
    %c24_i32 = arith.constant 24 : i32
    %19 = vector.broadcast %c24_i32 : i32 to vector<1x128xi32>
    %20 = arith.cmpi slt, %16, %19 : vector<1x128xi32>
    %c64_i32 = arith.constant 64 : i32
    %21 = vector.broadcast %c64_i32 : i32 to vector<1x128xi32>
    %22 = arith.cmpi sge, %0, %21 : vector<1x128xi32>
    %c96_i32 = arith.constant 96 : i32
    %23 = vector.broadcast %c96_i32 : i32 to vector<1x128xi32>
    %24 = arith.cmpi slt, %0, %23 : vector<1x128xi32>
    %25 = arith.andi %22, %24 : vector<1x128xi1>
    %26 = tpu.iota {dimensions = array<i32: 1>} : vector<1x16xi32>
    %c8_i32_3 = arith.constant 8 : i32
    %27 = vector.broadcast %c8_i32_3 : i32 to vector<1x16xi32>
    %28 = arith.cmpi slt, %26, %27 : vector<1x16xi32>
    %29 = tpu.iota {dimensions = array<i32: 1>} : vector<1x32xi32>
    %c16_i32 = arith.constant 16 : i32
    %30 = vector.broadcast %c16_i32 : i32 to vector<1x32xi32>
    %31 = arith.cmpi slt, %29, %30 : vector<1x32xi32>
    %c0 = arith.constant 0 : index
    %c0_4 = arith.constant 0 : index
    %32 = vector.load %arg2[%c0, %c0_4] : memref<88x128xf32, #tpu.memory_space<vmem>>, vector<8x128xf32>
    %c8 = arith.constant 8 : index
    %c0_5 = arith.constant 0 : index
    %33 = vector.load %arg2[%c8, %c0_5] : memref<88x128xf32, #tpu.memory_space<vmem>>, vector<32x128xf32>
    %c40 = arith.constant 40 : index
    %c0_6 = arith.constant 0 : index
    %34 = vector.load %arg2[%c40, %c0_6] : memref<88x128xf32, #tpu.memory_space<vmem>>, vector<16x128xf32>
    %c56 = arith.constant 56 : index
    %c0_7 = arith.constant 0 : index
    %35 = vector.load %arg2[%c56, %c0_7] : memref<88x128xf32, #tpu.memory_space<vmem>>, vector<1x128xf32>
    %c64 = arith.constant 64 : index
    %c0_8 = arith.constant 0 : index
    %36 = vector.load %arg2[%c64, %c0_8] : memref<88x128xf32, #tpu.memory_space<vmem>>, vector<16x128xf32>
    %c80 = arith.constant 80 : index
    %c0_9 = arith.constant 0 : index
    %37 = vector.load %arg2[%c80, %c0_9] : memref<88x128xf32, #tpu.memory_space<vmem>>, vector<1x128xf32>
    %c0_10 = arith.constant 0 : index
    %c0_11 = arith.constant 0 : index
    %38 = vector.load %arg1[%c0_10, %c0_11] : memref<16x8xf32, #tpu.memory_space<vmem>>, vector<16x8xf32>
    %cst = arith.constant dense<0.000000e+00> : vector<16x128xf32>
    %39 = tpu.matmul %38, %32, %cst {dimension_numbers = #tpu.dot_dimension_numbers<[1], [0], [0], [1], [0, 0, 1, 1], [], []>} : vector<16x8xf32>, vector<8x128xf32>, vector<16x128xf32> -> vector<16x128xf32>
    %40 = vector.broadcast %35 : vector<1x128xf32> to vector<16x128xf32>
    %41 = arith.addf %39, %40 : vector<16x128xf32>
    %cst_12 = arith.constant 0.000000e+00 : f32
    %42 = vector.broadcast %cst_12 : f32 to vector<1x32xf32>
    %cst_13 = arith.constant 0.000000e+00 : f32
    %43 = vector.broadcast %cst_13 : f32 to vector<1x128xf32>
    %44 = vector.extract_strided_slice %41 {offsets = [0, 0], sizes = [1, 128], strides = [1, 1]} : vector<16x128xf32> to vector<1x128xf32>
    %45 = vector.extract_strided_slice %41 {offsets = [1, 0], sizes = [1, 128], strides = [1, 1]} : vector<16x128xf32> to vector<1x128xf32>
    %46 = arith.select %18, %44, %45 : vector<1x128xi1>, vector<1x128xf32>
    %47 = arith.select %18, %45, %44 : vector<1x128xi1>, vector<1x128xf32>
    %48 = arith.addf %46, %43 : vector<1x128xf32>
    %cst_14 = arith.constant dense<0.000000e+00> : vector<1x128xf32>
    %49 = tpu.matmul %42, %33, %cst_14 {dimension_numbers = #tpu.dot_dimension_numbers<[1], [0], [0], [1], [0, 0, 1, 1], [], []>} : vector<1x32xf32>, vector<32x128xf32>, vector<1x128xf32> -> vector<1x128xf32>
    %50 = arith.addf %48, %49 : vector<1x128xf32>
    %51 = math.tanh %50 : vector<1x128xf32>
    %cst_15 = arith.constant 5.000000e-01 : f32
    %52 = vector.broadcast %cst_15 : f32 to vector<1x128xf32>
    %53 = arith.mulf %52, %51 : vector<1x128xf32>
    %cst_16 = arith.constant 5.000000e-01 : f32
    %54 = vector.broadcast %cst_16 : f32 to vector<1x128xf32>
    %55 = arith.addf %53, %54 : vector<1x128xf32>
    %56 = arith.select %25, %51, %55 : vector<1x128xi1>, vector<1x128xf32>
    %57 = vector.extract_strided_slice %56 {offsets = [0, 0], sizes = [1, 32], strides = [1, 1]} : vector<1x128xf32> to vector<1x32xf32>
    %58 = vector.extract_strided_slice %56 {offsets = [0, 32], sizes = [1, 32], strides = [1, 1]} : vector<1x128xf32> to vector<1x32xf32>
    %59 = vector.extract_strided_slice %56 {offsets = [0, 64], sizes = [1, 32], strides = [1, 1]} : vector<1x128xf32> to vector<1x32xf32>
    %60 = vector.extract_strided_slice %56 {offsets = [0, 96], sizes = [1, 32], strides = [1, 1]} : vector<1x128xf32> to vector<1x32xf32>
    %61 = arith.mulf %58, %42 : vector<1x32xf32>
    %62 = arith.mulf %57, %59 : vector<1x32xf32>
    %63 = arith.addf %61, %62 : vector<1x32xf32>
    %64 = math.tanh %63 : vector<1x32xf32>
    %65 = arith.mulf %60, %64 : vector<1x32xf32>
    %66 = arith.addf %47, %43 : vector<1x128xf32>
    %cst_17 = arith.constant dense<0.000000e+00> : vector<1x128xf32>
    %67 = tpu.matmul %65, %33, %cst_17 {dimension_numbers = #tpu.dot_dimension_numbers<[1], [0], [0], [1], [0, 0, 1, 1], [], []>} : vector<1x32xf32>, vector<32x128xf32>, vector<1x128xf32> -> vector<1x128xf32>
    %68 = arith.addf %66, %67 : vector<1x128xf32>
    %69 = math.tanh %68 : vector<1x128xf32>
    %cst_18 = arith.constant 5.000000e-01 : f32
    %70 = vector.broadcast %cst_18 : f32 to vector<1x128xf32>
    %71 = arith.mulf %70, %69 : vector<1x128xf32>
    %cst_19 = arith.constant 5.000000e-01 : f32
    %72 = vector.broadcast %cst_19 : f32 to vector<1x128xf32>
    %73 = arith.addf %71, %72 : vector<1x128xf32>
    %74 = arith.select %25, %69, %73 : vector<1x128xi1>, vector<1x128xf32>
    %75 = vector.extract_strided_slice %74 {offsets = [0, 0], sizes = [1, 32], strides = [1, 1]} : vector<1x128xf32> to vector<1x32xf32>
    %76 = vector.extract_strided_slice %74 {offsets = [0, 32], sizes = [1, 32], strides = [1, 1]} : vector<1x128xf32> to vector<1x32xf32>
    %77 = vector.extract_strided_slice %74 {offsets = [0, 64], sizes = [1, 32], strides = [1, 1]} : vector<1x128xf32> to vector<1x32xf32>
    %78 = vector.extract_strided_slice %74 {offsets = [0, 96], sizes = [1, 32], strides = [1, 1]} : vector<1x128xf32> to vector<1x32xf32>
    %79 = arith.mulf %76, %63 : vector<1x32xf32>
    %80 = arith.mulf %75, %77 : vector<1x32xf32>
    %81 = arith.addf %79, %80 : vector<1x32xf32>
    %82 = math.tanh %81 : vector<1x32xf32>
    %83 = arith.mulf %78, %82 : vector<1x32xf32>
    %cst_20 = arith.constant 0.000000e+00 : f32
    %84 = vector.broadcast %cst_20 : f32 to vector<1x32xf32>
    %85 = arith.select %31, %83, %84 : vector<1x32xi1>, vector<1x32xf32>
    %cst_21 = arith.constant 0.000000e+00 : f32
    %86 = vector.broadcast %cst_21 : f32 to vector<1x32xf32>
    %87 = arith.select %31, %81, %86 : vector<1x32xi1>, vector<1x32xf32>
    %88 = vector.extract_strided_slice %65 {offsets = [0, 0], sizes = [1, 16], strides = [1, 1]} : vector<1x32xf32> to vector<1x16xf32>
    %89 = vector.extract_strided_slice %83 {offsets = [0, 0], sizes = [1, 16], strides = [1, 1]} : vector<1x32xf32> to vector<1x16xf32>
    %90 = arith.select %28, %88, %89 : vector<1x16xi1>, vector<1x16xf32>
    %91 = vector.extract_strided_slice %83 {offsets = [0, 0], sizes = [1, 16], strides = [1, 1]} : vector<1x32xf32> to vector<1x16xf32>
    %92 = vector.extract_strided_slice %65 {offsets = [0, 0], sizes = [1, 16], strides = [1, 1]} : vector<1x32xf32> to vector<1x16xf32>
    %93 = arith.select %28, %91, %92 : vector<1x16xi1>, vector<1x16xf32>
    %94 = tpu.concatenate %90, %93 in 0 : vector<1x16xf32>, vector<1x16xf32> -> vector<2x16xf32>
    %cst_22 = arith.constant dense<0.000000e+00> : vector<2x128xf32>
    %95 = tpu.matmul %94, %34, %cst_22 {dimension_numbers = #tpu.dot_dimension_numbers<[1], [0], [0], [1], [0, 0, 1, 1], [], []>} : vector<2x16xf32>, vector<16x128xf32>, vector<2x128xf32> -> vector<2x128xf32>
    %96 = vector.extract_strided_slice %95 {offsets = [0, 0], sizes = [1, 128], strides = [1, 1]} : vector<2x128xf32> to vector<1x128xf32>
    %97 = vector.extract_strided_slice %95 {offsets = [1, 0], sizes = [1, 128], strides = [1, 1]} : vector<2x128xf32> to vector<1x128xf32>
    %98 = arith.select %20, %96, %97 : vector<1x128xi1>, vector<1x128xf32>
    %99 = arith.select %20, %97, %96 : vector<1x128xi1>, vector<1x128xf32>
    %100 = vector.extract_strided_slice %41 {offsets = [2, 0], sizes = [1, 128], strides = [1, 1]} : vector<16x128xf32> to vector<1x128xf32>
    %101 = vector.extract_strided_slice %41 {offsets = [3, 0], sizes = [1, 128], strides = [1, 1]} : vector<16x128xf32> to vector<1x128xf32>
    %102 = arith.select %18, %100, %101 : vector<1x128xi1>, vector<1x128xf32>
    %103 = arith.select %18, %101, %100 : vector<1x128xi1>, vector<1x128xf32>
    %104 = arith.addf %102, %98 : vector<1x128xf32>
    %cst_23 = arith.constant dense<0.000000e+00> : vector<1x128xf32>
    %105 = tpu.matmul %85, %33, %cst_23 {dimension_numbers = #tpu.dot_dimension_numbers<[1], [0], [0], [1], [0, 0, 1, 1], [], []>} : vector<1x32xf32>, vector<32x128xf32>, vector<1x128xf32> -> vector<1x128xf32>
    %106 = arith.addf %104, %105 : vector<1x128xf32>
    %107 = math.tanh %106 : vector<1x128xf32>
    %cst_24 = arith.constant 5.000000e-01 : f32
    %108 = vector.broadcast %cst_24 : f32 to vector<1x128xf32>
    %109 = arith.mulf %108, %107 : vector<1x128xf32>
    %cst_25 = arith.constant 5.000000e-01 : f32
    %110 = vector.broadcast %cst_25 : f32 to vector<1x128xf32>
    %111 = arith.addf %109, %110 : vector<1x128xf32>
    %112 = arith.select %25, %107, %111 : vector<1x128xi1>, vector<1x128xf32>
    %113 = vector.extract_strided_slice %112 {offsets = [0, 0], sizes = [1, 32], strides = [1, 1]} : vector<1x128xf32> to vector<1x32xf32>
    %114 = vector.extract_strided_slice %112 {offsets = [0, 32], sizes = [1, 32], strides = [1, 1]} : vector<1x128xf32> to vector<1x32xf32>
    %115 = vector.extract_strided_slice %112 {offsets = [0, 64], sizes = [1, 32], strides = [1, 1]} : vector<1x128xf32> to vector<1x32xf32>
    %116 = vector.extract_strided_slice %112 {offsets = [0, 96], sizes = [1, 32], strides = [1, 1]} : vector<1x128xf32> to vector<1x32xf32>
    %117 = arith.mulf %114, %87 : vector<1x32xf32>
    %118 = arith.mulf %113, %115 : vector<1x32xf32>
    %119 = arith.addf %117, %118 : vector<1x32xf32>
    %120 = math.tanh %119 : vector<1x32xf32>
    %121 = arith.mulf %116, %120 : vector<1x32xf32>
    %122 = arith.addf %103, %99 : vector<1x128xf32>
    %cst_26 = arith.constant dense<0.000000e+00> : vector<1x128xf32>
    %123 = tpu.matmul %121, %33, %cst_26 {dimension_numbers = #tpu.dot_dimension_numbers<[1], [0], [0], [1], [0, 0, 1, 1], [], []>} : vector<1x32xf32>, vector<32x128xf32>, vector<1x128xf32> -> vector<1x128xf32>
    %124 = arith.addf %122, %123 : vector<1x128xf32>
    %125 = math.tanh %124 : vector<1x128xf32>
    %cst_27 = arith.constant 5.000000e-01 : f32
    %126 = vector.broadcast %cst_27 : f32 to vector<1x128xf32>
    %127 = arith.mulf %126, %125 : vector<1x128xf32>
    %cst_28 = arith.constant 5.000000e-01 : f32
    %128 = vector.broadcast %cst_28 : f32 to vector<1x128xf32>
    %129 = arith.addf %127, %128 : vector<1x128xf32>
    %130 = arith.select %25, %125, %129 : vector<1x128xi1>, vector<1x128xf32>
    %131 = vector.extract_strided_slice %130 {offsets = [0, 0], sizes = [1, 32], strides = [1, 1]} : vector<1x128xf32> to vector<1x32xf32>
    %132 = vector.extract_strided_slice %130 {offsets = [0, 32], sizes = [1, 32], strides = [1, 1]} : vector<1x128xf32> to vector<1x32xf32>
    %133 = vector.extract_strided_slice %130 {offsets = [0, 64], sizes = [1, 32], strides = [1, 1]} : vector<1x128xf32> to vector<1x32xf32>
    %134 = vector.extract_strided_slice %130 {offsets = [0, 96], sizes = [1, 32], strides = [1, 1]} : vector<1x128xf32> to vector<1x32xf32>
    %135 = arith.mulf %132, %119 : vector<1x32xf32>
    %136 = arith.mulf %131, %133 : vector<1x32xf32>
    %137 = arith.addf %135, %136 : vector<1x32xf32>
    %138 = math.tanh %137 : vector<1x32xf32>
    %139 = arith.mulf %134, %138 : vector<1x32xf32>
    %140 = vector.extract_strided_slice %121 {offsets = [0, 16], sizes = [1, 16], strides = [1, 1]} : vector<1x32xf32> to vector<1x16xf32>
    %141 = vector.extract_strided_slice %139 {offsets = [0, 16], sizes = [1, 16], strides = [1, 1]} : vector<1x32xf32> to vector<1x16xf32>
    %142 = arith.select %28, %140, %141 : vector<1x16xi1>, vector<1x16xf32>
    %143 = vector.extract_strided_slice %139 {offsets = [0, 16], sizes = [1, 16], strides = [1, 1]} : vector<1x32xf32> to vector<1x16xf32>
    %144 = vector.extract_strided_slice %121 {offsets = [0, 16], sizes = [1, 16], strides = [1, 1]} : vector<1x32xf32> to vector<1x16xf32>
    %145 = arith.select %28, %143, %144 : vector<1x16xi1>, vector<1x16xf32>
    %146 = tpu.concatenate %142, %145 in 0 : vector<1x16xf32>, vector<1x16xf32> -> vector<2x16xf32>
    %147 = vector.extract_strided_slice %121 {offsets = [0, 0], sizes = [1, 16], strides = [1, 1]} : vector<1x32xf32> to vector<1x16xf32>
    %148 = vector.extract_strided_slice %139 {offsets = [0, 0], sizes = [1, 16], strides = [1, 1]} : vector<1x32xf32> to vector<1x16xf32>
    %149 = arith.select %28, %147, %148 : vector<1x16xi1>, vector<1x16xf32>
    %150 = vector.extract_strided_slice %139 {offsets = [0, 0], sizes = [1, 16], strides = [1, 1]} : vector<1x32xf32> to vector<1x16xf32>
    %151 = vector.extract_strided_slice %121 {offsets = [0, 0], sizes = [1, 16], strides = [1, 1]} : vector<1x32xf32> to vector<1x16xf32>
    %152 = arith.select %28, %150, %151 : vector<1x16xi1>, vector<1x16xf32>
    %153 = tpu.concatenate %149, %152 in 0 : vector<1x16xf32>, vector<1x16xf32> -> vector<2x16xf32>
    %cst_29 = arith.constant dense<0.000000e+00> : vector<2x128xf32>
    %154 = tpu.matmul %153, %34, %cst_29 {dimension_numbers = #tpu.dot_dimension_numbers<[1], [0], [0], [1], [0, 0, 1, 1], [], []>} : vector<2x16xf32>, vector<16x128xf32>, vector<2x128xf32> -> vector<2x128xf32>
    %155 = vector.extract_strided_slice %154 {offsets = [0, 0], sizes = [1, 128], strides = [1, 1]} : vector<2x128xf32> to vector<1x128xf32>
    %156 = vector.extract_strided_slice %154 {offsets = [1, 0], sizes = [1, 128], strides = [1, 1]} : vector<2x128xf32> to vector<1x128xf32>
    %157 = arith.select %20, %155, %156 : vector<1x128xi1>, vector<1x128xf32>
    %158 = arith.select %20, %156, %155 : vector<1x128xi1>, vector<1x128xf32>
    %159 = vector.extract_strided_slice %41 {offsets = [4, 0], sizes = [1, 128], strides = [1, 1]} : vector<16x128xf32> to vector<1x128xf32>
    %160 = vector.extract_strided_slice %41 {offsets = [5, 0], sizes = [1, 128], strides = [1, 1]} : vector<16x128xf32> to vector<1x128xf32>
    %161 = arith.select %18, %159, %160 : vector<1x128xi1>, vector<1x128xf32>
    %162 = arith.select %18, %160, %159 : vector<1x128xi1>, vector<1x128xf32>
    %163 = arith.addf %161, %157 : vector<1x128xf32>
    %cst_30 = arith.constant dense<0.000000e+00> : vector<1x128xf32>
    %164 = tpu.matmul %139, %33, %cst_30 {dimension_numbers = #tpu.dot_dimension_numbers<[1], [0], [0], [1], [0, 0, 1, 1], [], []>} : vector<1x32xf32>, vector<32x128xf32>, vector<1x128xf32> -> vector<1x128xf32>
    %165 = arith.addf %163, %164 : vector<1x128xf32>
    %166 = math.tanh %165 : vector<1x128xf32>
    %cst_31 = arith.constant 5.000000e-01 : f32
    %167 = vector.broadcast %cst_31 : f32 to vector<1x128xf32>
    %168 = arith.mulf %167, %166 : vector<1x128xf32>
    %cst_32 = arith.constant 5.000000e-01 : f32
    %169 = vector.broadcast %cst_32 : f32 to vector<1x128xf32>
    %170 = arith.addf %168, %169 : vector<1x128xf32>
    %171 = arith.select %25, %166, %170 : vector<1x128xi1>, vector<1x128xf32>
    %172 = vector.extract_strided_slice %171 {offsets = [0, 0], sizes = [1, 32], strides = [1, 1]} : vector<1x128xf32> to vector<1x32xf32>
    %173 = vector.extract_strided_slice %171 {offsets = [0, 32], sizes = [1, 32], strides = [1, 1]} : vector<1x128xf32> to vector<1x32xf32>
    %174 = vector.extract_strided_slice %171 {offsets = [0, 64], sizes = [1, 32], strides = [1, 1]} : vector<1x128xf32> to vector<1x32xf32>
    %175 = vector.extract_strided_slice %171 {offsets = [0, 96], sizes = [1, 32], strides = [1, 1]} : vector<1x128xf32> to vector<1x32xf32>
    %176 = arith.mulf %173, %137 : vector<1x32xf32>
    %177 = arith.mulf %172, %174 : vector<1x32xf32>
    %178 = arith.addf %176, %177 : vector<1x32xf32>
    %179 = math.tanh %178 : vector<1x32xf32>
    %180 = arith.mulf %175, %179 : vector<1x32xf32>
    %181 = arith.addf %162, %158 : vector<1x128xf32>
    %cst_33 = arith.constant dense<0.000000e+00> : vector<1x128xf32>
    %182 = tpu.matmul %180, %33, %cst_33 {dimension_numbers = #tpu.dot_dimension_numbers<[1], [0], [0], [1], [0, 0, 1, 1], [], []>} : vector<1x32xf32>, vector<32x128xf32>, vector<1x128xf32> -> vector<1x128xf32>
    %183 = arith.addf %181, %182 : vector<1x128xf32>
    %184 = math.tanh %183 : vector<1x128xf32>
    %cst_34 = arith.constant 5.000000e-01 : f32
    %185 = vector.broadcast %cst_34 : f32 to vector<1x128xf32>
    %186 = arith.mulf %185, %184 : vector<1x128xf32>
    %cst_35 = arith.constant 5.000000e-01 : f32
    %187 = vector.broadcast %cst_35 : f32 to vector<1x128xf32>
    %188 = arith.addf %186, %187 : vector<1x128xf32>
    %189 = arith.select %25, %184, %188 : vector<1x128xi1>, vector<1x128xf32>
    %190 = vector.extract_strided_slice %189 {offsets = [0, 0], sizes = [1, 32], strides = [1, 1]} : vector<1x128xf32> to vector<1x32xf32>
    %191 = vector.extract_strided_slice %189 {offsets = [0, 32], sizes = [1, 32], strides = [1, 1]} : vector<1x128xf32> to vector<1x32xf32>
    %192 = vector.extract_strided_slice %189 {offsets = [0, 64], sizes = [1, 32], strides = [1, 1]} : vector<1x128xf32> to vector<1x32xf32>
    %193 = vector.extract_strided_slice %189 {offsets = [0, 96], sizes = [1, 32], strides = [1, 1]} : vector<1x128xf32> to vector<1x32xf32>
    %194 = arith.mulf %191, %178 : vector<1x32xf32>
    %195 = arith.mulf %190, %192 : vector<1x32xf32>
    %196 = arith.addf %194, %195 : vector<1x32xf32>
    %197 = math.tanh %196 : vector<1x32xf32>
    %198 = arith.mulf %193, %197 : vector<1x32xf32>
    %199 = vector.extract_strided_slice %180 {offsets = [0, 16], sizes = [1, 16], strides = [1, 1]} : vector<1x32xf32> to vector<1x16xf32>
    %200 = vector.extract_strided_slice %198 {offsets = [0, 16], sizes = [1, 16], strides = [1, 1]} : vector<1x32xf32> to vector<1x16xf32>
    %201 = arith.select %28, %199, %200 : vector<1x16xi1>, vector<1x16xf32>
    %202 = vector.extract_strided_slice %198 {offsets = [0, 16], sizes = [1, 16], strides = [1, 1]} : vector<1x32xf32> to vector<1x16xf32>
    %203 = vector.extract_strided_slice %180 {offsets = [0, 16], sizes = [1, 16], strides = [1, 1]} : vector<1x32xf32> to vector<1x16xf32>
    %204 = arith.select %28, %202, %203 : vector<1x16xi1>, vector<1x16xf32>
    %205 = tpu.concatenate %201, %204 in 0 : vector<1x16xf32>, vector<1x16xf32> -> vector<2x16xf32>
    %206 = vector.extract_strided_slice %180 {offsets = [0, 0], sizes = [1, 16], strides = [1, 1]} : vector<1x32xf32> to vector<1x16xf32>
    %207 = vector.extract_strided_slice %198 {offsets = [0, 0], sizes = [1, 16], strides = [1, 1]} : vector<1x32xf32> to vector<1x16xf32>
    %208 = arith.select %28, %206, %207 : vector<1x16xi1>, vector<1x16xf32>
    %209 = vector.extract_strided_slice %198 {offsets = [0, 0], sizes = [1, 16], strides = [1, 1]} : vector<1x32xf32> to vector<1x16xf32>
    %210 = vector.extract_strided_slice %180 {offsets = [0, 0], sizes = [1, 16], strides = [1, 1]} : vector<1x32xf32> to vector<1x16xf32>
    %211 = arith.select %28, %209, %210 : vector<1x16xi1>, vector<1x16xf32>
    %212 = tpu.concatenate %208, %211 in 0 : vector<1x16xf32>, vector<1x16xf32> -> vector<2x16xf32>
    %cst_36 = arith.constant dense<0.000000e+00> : vector<2x128xf32>
    %213 = tpu.matmul %212, %34, %cst_36 {dimension_numbers = #tpu.dot_dimension_numbers<[1], [0], [0], [1], [0, 0, 1, 1], [], []>} : vector<2x16xf32>, vector<16x128xf32>, vector<2x128xf32> -> vector<2x128xf32>
    %214 = vector.extract_strided_slice %213 {offsets = [0, 0], sizes = [1, 128], strides = [1, 1]} : vector<2x128xf32> to vector<1x128xf32>
    %215 = vector.extract_strided_slice %213 {offsets = [1, 0], sizes = [1, 128], strides = [1, 1]} : vector<2x128xf32> to vector<1x128xf32>
    %216 = arith.select %20, %214, %215 : vector<1x128xi1>, vector<1x128xf32>
    %217 = arith.select %20, %215, %214 : vector<1x128xi1>, vector<1x128xf32>
    %218 = vector.extract_strided_slice %41 {offsets = [6, 0], sizes = [1, 128], strides = [1, 1]} : vector<16x128xf32> to vector<1x128xf32>
    %219 = vector.extract_strided_slice %41 {offsets = [7, 0], sizes = [1, 128], strides = [1, 1]} : vector<16x128xf32> to vector<1x128xf32>
    %220 = arith.select %18, %218, %219 : vector<1x128xi1>, vector<1x128xf32>
    %221 = arith.select %18, %219, %218 : vector<1x128xi1>, vector<1x128xf32>
    %222 = arith.addf %220, %216 : vector<1x128xf32>
    %cst_37 = arith.constant dense<0.000000e+00> : vector<1x128xf32>
    %223 = tpu.matmul %198, %33, %cst_37 {dimension_numbers = #tpu.dot_dimension_numbers<[1], [0], [0], [1], [0, 0, 1, 1], [], []>} : vector<1x32xf32>, vector<32x128xf32>, vector<1x128xf32> -> vector<1x128xf32>
    %224 = arith.addf %222, %223 : vector<1x128xf32>
    %225 = math.tanh %224 : vector<1x128xf32>
    %cst_38 = arith.constant 5.000000e-01 : f32
    %226 = vector.broadcast %cst_38 : f32 to vector<1x128xf32>
    %227 = arith.mulf %226, %225 : vector<1x128xf32>
    %cst_39 = arith.constant 5.000000e-01 : f32
    %228 = vector.broadcast %cst_39 : f32 to vector<1x128xf32>
    %229 = arith.addf %227, %228 : vector<1x128xf32>
    %230 = arith.select %25, %225, %229 : vector<1x128xi1>, vector<1x128xf32>
    %231 = vector.extract_strided_slice %230 {offsets = [0, 0], sizes = [1, 32], strides = [1, 1]} : vector<1x128xf32> to vector<1x32xf32>
    %232 = vector.extract_strided_slice %230 {offsets = [0, 32], sizes = [1, 32], strides = [1, 1]} : vector<1x128xf32> to vector<1x32xf32>
    %233 = vector.extract_strided_slice %230 {offsets = [0, 64], sizes = [1, 32], strides = [1, 1]} : vector<1x128xf32> to vector<1x32xf32>
    %234 = vector.extract_strided_slice %230 {offsets = [0, 96], sizes = [1, 32], strides = [1, 1]} : vector<1x128xf32> to vector<1x32xf32>
    %235 = arith.mulf %232, %196 : vector<1x32xf32>
    %236 = arith.mulf %231, %233 : vector<1x32xf32>
    %237 = arith.addf %235, %236 : vector<1x32xf32>
    %238 = math.tanh %237 : vector<1x32xf32>
    %239 = arith.mulf %234, %238 : vector<1x32xf32>
    %240 = arith.addf %221, %217 : vector<1x128xf32>
    %cst_40 = arith.constant dense<0.000000e+00> : vector<1x128xf32>
    %241 = tpu.matmul %239, %33, %cst_40 {dimension_numbers = #tpu.dot_dimension_numbers<[1], [0], [0], [1], [0, 0, 1, 1], [], []>} : vector<1x32xf32>, vector<32x128xf32>, vector<1x128xf32> -> vector<1x128xf32>
    %242 = arith.addf %240, %241 : vector<1x128xf32>
    %243 = math.tanh %242 : vector<1x128xf32>
    %cst_41 = arith.constant 5.000000e-01 : f32
    %244 = vector.broadcast %cst_41 : f32 to vector<1x128xf32>
    %245 = arith.mulf %244, %243 : vector<1x128xf32>
    %cst_42 = arith.constant 5.000000e-01 : f32
    %246 = vector.broadcast %cst_42 : f32 to vector<1x128xf32>
    %247 = arith.addf %245, %246 : vector<1x128xf32>
    %248 = arith.select %25, %243, %247 : vector<1x128xi1>, vector<1x128xf32>
    %249 = vector.extract_strided_slice %248 {offsets = [0, 0], sizes = [1, 32], strides = [1, 1]} : vector<1x128xf32> to vector<1x32xf32>
    %250 = vector.extract_strided_slice %248 {offsets = [0, 32], sizes = [1, 32], strides = [1, 1]} : vector<1x128xf32> to vector<1x32xf32>
    %251 = vector.extract_strided_slice %248 {offsets = [0, 64], sizes = [1, 32], strides = [1, 1]} : vector<1x128xf32> to vector<1x32xf32>
    %252 = vector.extract_strided_slice %248 {offsets = [0, 96], sizes = [1, 32], strides = [1, 1]} : vector<1x128xf32> to vector<1x32xf32>
    %253 = arith.mulf %250, %237 : vector<1x32xf32>
    %254 = arith.mulf %249, %251 : vector<1x32xf32>
    %255 = arith.addf %253, %254 : vector<1x32xf32>
    %256 = math.tanh %255 : vector<1x32xf32>
    %257 = arith.mulf %252, %256 : vector<1x32xf32>
    %258 = vector.extract_strided_slice %239 {offsets = [0, 16], sizes = [1, 16], strides = [1, 1]} : vector<1x32xf32> to vector<1x16xf32>
    %259 = vector.extract_strided_slice %257 {offsets = [0, 16], sizes = [1, 16], strides = [1, 1]} : vector<1x32xf32> to vector<1x16xf32>
    %260 = arith.select %28, %258, %259 : vector<1x16xi1>, vector<1x16xf32>
    %261 = vector.extract_strided_slice %257 {offsets = [0, 16], sizes = [1, 16], strides = [1, 1]} : vector<1x32xf32> to vector<1x16xf32>
    %262 = vector.extract_strided_slice %239 {offsets = [0, 16], sizes = [1, 16], strides = [1, 1]} : vector<1x32xf32> to vector<1x16xf32>
    %263 = arith.select %28, %261, %262 : vector<1x16xi1>, vector<1x16xf32>
    %264 = tpu.concatenate %260, %263 in 0 : vector<1x16xf32>, vector<1x16xf32> -> vector<2x16xf32>
    %265 = vector.extract_strided_slice %239 {offsets = [0, 0], sizes = [1, 16], strides = [1, 1]} : vector<1x32xf32> to vector<1x16xf32>
    %266 = vector.extract_strided_slice %257 {offsets = [0, 0], sizes = [1, 16], strides = [1, 1]} : vector<1x32xf32> to vector<1x16xf32>
    %267 = arith.select %28, %265, %266 : vector<1x16xi1>, vector<1x16xf32>
    %268 = vector.extract_strided_slice %257 {offsets = [0, 0], sizes = [1, 16], strides = [1, 1]} : vector<1x32xf32> to vector<1x16xf32>
    %269 = vector.extract_strided_slice %239 {offsets = [0, 0], sizes = [1, 16], strides = [1, 1]} : vector<1x32xf32> to vector<1x16xf32>
    %270 = arith.select %28, %268, %269 : vector<1x16xi1>, vector<1x16xf32>
    %271 = tpu.concatenate %267, %270 in 0 : vector<1x16xf32>, vector<1x16xf32> -> vector<2x16xf32>
    %cst_43 = arith.constant dense<0.000000e+00> : vector<2x128xf32>
    %272 = tpu.matmul %271, %34, %cst_43 {dimension_numbers = #tpu.dot_dimension_numbers<[1], [0], [0], [1], [0, 0, 1, 1], [], []>} : vector<2x16xf32>, vector<16x128xf32>, vector<2x128xf32> -> vector<2x128xf32>
    %273 = vector.extract_strided_slice %272 {offsets = [0, 0], sizes = [1, 128], strides = [1, 1]} : vector<2x128xf32> to vector<1x128xf32>
    %274 = vector.extract_strided_slice %272 {offsets = [1, 0], sizes = [1, 128], strides = [1, 1]} : vector<2x128xf32> to vector<1x128xf32>
    %275 = arith.select %20, %273, %274 : vector<1x128xi1>, vector<1x128xf32>
    %276 = arith.select %20, %274, %273 : vector<1x128xi1>, vector<1x128xf32>
    %277 = vector.extract_strided_slice %41 {offsets = [8, 0], sizes = [1, 128], strides = [1, 1]} : vector<16x128xf32> to vector<1x128xf32>
    %278 = vector.extract_strided_slice %41 {offsets = [9, 0], sizes = [1, 128], strides = [1, 1]} : vector<16x128xf32> to vector<1x128xf32>
    %279 = arith.select %18, %277, %278 : vector<1x128xi1>, vector<1x128xf32>
    %280 = arith.select %18, %278, %277 : vector<1x128xi1>, vector<1x128xf32>
    %281 = arith.addf %279, %275 : vector<1x128xf32>
    %cst_44 = arith.constant dense<0.000000e+00> : vector<1x128xf32>
    %282 = tpu.matmul %257, %33, %cst_44 {dimension_numbers = #tpu.dot_dimension_numbers<[1], [0], [0], [1], [0, 0, 1, 1], [], []>} : vector<1x32xf32>, vector<32x128xf32>, vector<1x128xf32> -> vector<1x128xf32>
    %283 = arith.addf %281, %282 : vector<1x128xf32>
    %284 = math.tanh %283 : vector<1x128xf32>
    %cst_45 = arith.constant 5.000000e-01 : f32
    %285 = vector.broadcast %cst_45 : f32 to vector<1x128xf32>
    %286 = arith.mulf %285, %284 : vector<1x128xf32>
    %cst_46 = arith.constant 5.000000e-01 : f32
    %287 = vector.broadcast %cst_46 : f32 to vector<1x128xf32>
    %288 = arith.addf %286, %287 : vector<1x128xf32>
    %289 = arith.select %25, %284, %288 : vector<1x128xi1>, vector<1x128xf32>
    %290 = vector.extract_strided_slice %289 {offsets = [0, 0], sizes = [1, 32], strides = [1, 1]} : vector<1x128xf32> to vector<1x32xf32>
    %291 = vector.extract_strided_slice %289 {offsets = [0, 32], sizes = [1, 32], strides = [1, 1]} : vector<1x128xf32> to vector<1x32xf32>
    %292 = vector.extract_strided_slice %289 {offsets = [0, 64], sizes = [1, 32], strides = [1, 1]} : vector<1x128xf32> to vector<1x32xf32>
    %293 = vector.extract_strided_slice %289 {offsets = [0, 96], sizes = [1, 32], strides = [1, 1]} : vector<1x128xf32> to vector<1x32xf32>
    %294 = arith.mulf %291, %255 : vector<1x32xf32>
    %295 = arith.mulf %290, %292 : vector<1x32xf32>
    %296 = arith.addf %294, %295 : vector<1x32xf32>
    %297 = math.tanh %296 : vector<1x32xf32>
    %298 = arith.mulf %293, %297 : vector<1x32xf32>
    %299 = arith.addf %280, %276 : vector<1x128xf32>
    %cst_47 = arith.constant dense<0.000000e+00> : vector<1x128xf32>
    %300 = tpu.matmul %298, %33, %cst_47 {dimension_numbers = #tpu.dot_dimension_numbers<[1], [0], [0], [1], [0, 0, 1, 1], [], []>} : vector<1x32xf32>, vector<32x128xf32>, vector<1x128xf32> -> vector<1x128xf32>
    %301 = arith.addf %299, %300 : vector<1x128xf32>
    %302 = math.tanh %301 : vector<1x128xf32>
    %cst_48 = arith.constant 5.000000e-01 : f32
    %303 = vector.broadcast %cst_48 : f32 to vector<1x128xf32>
    %304 = arith.mulf %303, %302 : vector<1x128xf32>
    %cst_49 = arith.constant 5.000000e-01 : f32
    %305 = vector.broadcast %cst_49 : f32 to vector<1x128xf32>
    %306 = arith.addf %304, %305 : vector<1x128xf32>
    %307 = arith.select %25, %302, %306 : vector<1x128xi1>, vector<1x128xf32>
    %308 = vector.extract_strided_slice %307 {offsets = [0, 0], sizes = [1, 32], strides = [1, 1]} : vector<1x128xf32> to vector<1x32xf32>
    %309 = vector.extract_strided_slice %307 {offsets = [0, 32], sizes = [1, 32], strides = [1, 1]} : vector<1x128xf32> to vector<1x32xf32>
    %310 = vector.extract_strided_slice %307 {offsets = [0, 64], sizes = [1, 32], strides = [1, 1]} : vector<1x128xf32> to vector<1x32xf32>
    %311 = vector.extract_strided_slice %307 {offsets = [0, 96], sizes = [1, 32], strides = [1, 1]} : vector<1x128xf32> to vector<1x32xf32>
    %312 = arith.mulf %309, %296 : vector<1x32xf32>
    %313 = arith.mulf %308, %310 : vector<1x32xf32>
    %314 = arith.addf %312, %313 : vector<1x32xf32>
    %315 = math.tanh %314 : vector<1x32xf32>
    %316 = arith.mulf %311, %315 : vector<1x32xf32>
    %317 = vector.extract_strided_slice %298 {offsets = [0, 16], sizes = [1, 16], strides = [1, 1]} : vector<1x32xf32> to vector<1x16xf32>
    %318 = vector.extract_strided_slice %316 {offsets = [0, 16], sizes = [1, 16], strides = [1, 1]} : vector<1x32xf32> to vector<1x16xf32>
    %319 = arith.select %28, %317, %318 : vector<1x16xi1>, vector<1x16xf32>
    %320 = vector.extract_strided_slice %316 {offsets = [0, 16], sizes = [1, 16], strides = [1, 1]} : vector<1x32xf32> to vector<1x16xf32>
    %321 = vector.extract_strided_slice %298 {offsets = [0, 16], sizes = [1, 16], strides = [1, 1]} : vector<1x32xf32> to vector<1x16xf32>
    %322 = arith.select %28, %320, %321 : vector<1x16xi1>, vector<1x16xf32>
    %323 = tpu.concatenate %319, %322 in 0 : vector<1x16xf32>, vector<1x16xf32> -> vector<2x16xf32>
    %324 = vector.extract_strided_slice %298 {offsets = [0, 0], sizes = [1, 16], strides = [1, 1]} : vector<1x32xf32> to vector<1x16xf32>
    %325 = vector.extract_strided_slice %316 {offsets = [0, 0], sizes = [1, 16], strides = [1, 1]} : vector<1x32xf32> to vector<1x16xf32>
    %326 = arith.select %28, %324, %325 : vector<1x16xi1>, vector<1x16xf32>
    %327 = vector.extract_strided_slice %316 {offsets = [0, 0], sizes = [1, 16], strides = [1, 1]} : vector<1x32xf32> to vector<1x16xf32>
    %328 = vector.extract_strided_slice %298 {offsets = [0, 0], sizes = [1, 16], strides = [1, 1]} : vector<1x32xf32> to vector<1x16xf32>
    %329 = arith.select %28, %327, %328 : vector<1x16xi1>, vector<1x16xf32>
    %330 = tpu.concatenate %326, %329 in 0 : vector<1x16xf32>, vector<1x16xf32> -> vector<2x16xf32>
    %cst_50 = arith.constant dense<0.000000e+00> : vector<2x128xf32>
    %331 = tpu.matmul %330, %34, %cst_50 {dimension_numbers = #tpu.dot_dimension_numbers<[1], [0], [0], [1], [0, 0, 1, 1], [], []>} : vector<2x16xf32>, vector<16x128xf32>, vector<2x128xf32> -> vector<2x128xf32>
    %332 = vector.extract_strided_slice %331 {offsets = [0, 0], sizes = [1, 128], strides = [1, 1]} : vector<2x128xf32> to vector<1x128xf32>
    %333 = vector.extract_strided_slice %331 {offsets = [1, 0], sizes = [1, 128], strides = [1, 1]} : vector<2x128xf32> to vector<1x128xf32>
    %334 = arith.select %20, %332, %333 : vector<1x128xi1>, vector<1x128xf32>
    %335 = arith.select %20, %333, %332 : vector<1x128xi1>, vector<1x128xf32>
    %336 = vector.extract_strided_slice %41 {offsets = [10, 0], sizes = [1, 128], strides = [1, 1]} : vector<16x128xf32> to vector<1x128xf32>
    %337 = vector.extract_strided_slice %41 {offsets = [11, 0], sizes = [1, 128], strides = [1, 1]} : vector<16x128xf32> to vector<1x128xf32>
    %338 = arith.select %18, %336, %337 : vector<1x128xi1>, vector<1x128xf32>
    %339 = arith.select %18, %337, %336 : vector<1x128xi1>, vector<1x128xf32>
    %340 = arith.addf %338, %334 : vector<1x128xf32>
    %cst_51 = arith.constant dense<0.000000e+00> : vector<1x128xf32>
    %341 = tpu.matmul %316, %33, %cst_51 {dimension_numbers = #tpu.dot_dimension_numbers<[1], [0], [0], [1], [0, 0, 1, 1], [], []>} : vector<1x32xf32>, vector<32x128xf32>, vector<1x128xf32> -> vector<1x128xf32>
    %342 = arith.addf %340, %341 : vector<1x128xf32>
    %343 = math.tanh %342 : vector<1x128xf32>
    %cst_52 = arith.constant 5.000000e-01 : f32
    %344 = vector.broadcast %cst_52 : f32 to vector<1x128xf32>
    %345 = arith.mulf %344, %343 : vector<1x128xf32>
    %cst_53 = arith.constant 5.000000e-01 : f32
    %346 = vector.broadcast %cst_53 : f32 to vector<1x128xf32>
    %347 = arith.addf %345, %346 : vector<1x128xf32>
    %348 = arith.select %25, %343, %347 : vector<1x128xi1>, vector<1x128xf32>
    %349 = vector.extract_strided_slice %348 {offsets = [0, 0], sizes = [1, 32], strides = [1, 1]} : vector<1x128xf32> to vector<1x32xf32>
    %350 = vector.extract_strided_slice %348 {offsets = [0, 32], sizes = [1, 32], strides = [1, 1]} : vector<1x128xf32> to vector<1x32xf32>
    %351 = vector.extract_strided_slice %348 {offsets = [0, 64], sizes = [1, 32], strides = [1, 1]} : vector<1x128xf32> to vector<1x32xf32>
    %352 = vector.extract_strided_slice %348 {offsets = [0, 96], sizes = [1, 32], strides = [1, 1]} : vector<1x128xf32> to vector<1x32xf32>
    %353 = arith.mulf %350, %314 : vector<1x32xf32>
    %354 = arith.mulf %349, %351 : vector<1x32xf32>
    %355 = arith.addf %353, %354 : vector<1x32xf32>
    %356 = math.tanh %355 : vector<1x32xf32>
    %357 = arith.mulf %352, %356 : vector<1x32xf32>
    %358 = arith.addf %339, %335 : vector<1x128xf32>
    %cst_54 = arith.constant dense<0.000000e+00> : vector<1x128xf32>
    %359 = tpu.matmul %357, %33, %cst_54 {dimension_numbers = #tpu.dot_dimension_numbers<[1], [0], [0], [1], [0, 0, 1, 1], [], []>} : vector<1x32xf32>, vector<32x128xf32>, vector<1x128xf32> -> vector<1x128xf32>
    %360 = arith.addf %358, %359 : vector<1x128xf32>
    %361 = math.tanh %360 : vector<1x128xf32>
    %cst_55 = arith.constant 5.000000e-01 : f32
    %362 = vector.broadcast %cst_55 : f32 to vector<1x128xf32>
    %363 = arith.mulf %362, %361 : vector<1x128xf32>
    %cst_56 = arith.constant 5.000000e-01 : f32
    %364 = vector.broadcast %cst_56 : f32 to vector<1x128xf32>
    %365 = arith.addf %363, %364 : vector<1x128xf32>
    %366 = arith.select %25, %361, %365 : vector<1x128xi1>, vector<1x128xf32>
    %367 = vector.extract_strided_slice %366 {offsets = [0, 0], sizes = [1, 32], strides = [1, 1]} : vector<1x128xf32> to vector<1x32xf32>
    %368 = vector.extract_strided_slice %366 {offsets = [0, 32], sizes = [1, 32], strides = [1, 1]} : vector<1x128xf32> to vector<1x32xf32>
    %369 = vector.extract_strided_slice %366 {offsets = [0, 64], sizes = [1, 32], strides = [1, 1]} : vector<1x128xf32> to vector<1x32xf32>
    %370 = vector.extract_strided_slice %366 {offsets = [0, 96], sizes = [1, 32], strides = [1, 1]} : vector<1x128xf32> to vector<1x32xf32>
    %371 = arith.mulf %368, %355 : vector<1x32xf32>
    %372 = arith.mulf %367, %369 : vector<1x32xf32>
    %373 = arith.addf %371, %372 : vector<1x32xf32>
    %374 = math.tanh %373 : vector<1x32xf32>
    %375 = arith.mulf %370, %374 : vector<1x32xf32>
    %376 = vector.extract_strided_slice %357 {offsets = [0, 16], sizes = [1, 16], strides = [1, 1]} : vector<1x32xf32> to vector<1x16xf32>
    %377 = vector.extract_strided_slice %375 {offsets = [0, 16], sizes = [1, 16], strides = [1, 1]} : vector<1x32xf32> to vector<1x16xf32>
    %378 = arith.select %28, %376, %377 : vector<1x16xi1>, vector<1x16xf32>
    %379 = vector.extract_strided_slice %375 {offsets = [0, 16], sizes = [1, 16], strides = [1, 1]} : vector<1x32xf32> to vector<1x16xf32>
    %380 = vector.extract_strided_slice %357 {offsets = [0, 16], sizes = [1, 16], strides = [1, 1]} : vector<1x32xf32> to vector<1x16xf32>
    %381 = arith.select %28, %379, %380 : vector<1x16xi1>, vector<1x16xf32>
    %382 = tpu.concatenate %378, %381 in 0 : vector<1x16xf32>, vector<1x16xf32> -> vector<2x16xf32>
    %383 = vector.extract_strided_slice %357 {offsets = [0, 0], sizes = [1, 16], strides = [1, 1]} : vector<1x32xf32> to vector<1x16xf32>
    %384 = vector.extract_strided_slice %375 {offsets = [0, 0], sizes = [1, 16], strides = [1, 1]} : vector<1x32xf32> to vector<1x16xf32>
    %385 = arith.select %28, %383, %384 : vector<1x16xi1>, vector<1x16xf32>
    %386 = vector.extract_strided_slice %375 {offsets = [0, 0], sizes = [1, 16], strides = [1, 1]} : vector<1x32xf32> to vector<1x16xf32>
    %387 = vector.extract_strided_slice %357 {offsets = [0, 0], sizes = [1, 16], strides = [1, 1]} : vector<1x32xf32> to vector<1x16xf32>
    %388 = arith.select %28, %386, %387 : vector<1x16xi1>, vector<1x16xf32>
    %389 = tpu.concatenate %385, %388 in 0 : vector<1x16xf32>, vector<1x16xf32> -> vector<2x16xf32>
    %cst_57 = arith.constant dense<0.000000e+00> : vector<2x128xf32>
    %390 = tpu.matmul %389, %34, %cst_57 {dimension_numbers = #tpu.dot_dimension_numbers<[1], [0], [0], [1], [0, 0, 1, 1], [], []>} : vector<2x16xf32>, vector<16x128xf32>, vector<2x128xf32> -> vector<2x128xf32>
    %391 = vector.extract_strided_slice %390 {offsets = [0, 0], sizes = [1, 128], strides = [1, 1]} : vector<2x128xf32> to vector<1x128xf32>
    %392 = vector.extract_strided_slice %390 {offsets = [1, 0], sizes = [1, 128], strides = [1, 1]} : vector<2x128xf32> to vector<1x128xf32>
    %393 = arith.select %20, %391, %392 : vector<1x128xi1>, vector<1x128xf32>
    %394 = arith.select %20, %392, %391 : vector<1x128xi1>, vector<1x128xf32>
    %395 = vector.extract_strided_slice %41 {offsets = [12, 0], sizes = [1, 128], strides = [1, 1]} : vector<16x128xf32> to vector<1x128xf32>
    %396 = vector.extract_strided_slice %41 {offsets = [13, 0], sizes = [1, 128], strides = [1, 1]} : vector<16x128xf32> to vector<1x128xf32>
    %397 = arith.select %18, %395, %396 : vector<1x128xi1>, vector<1x128xf32>
    %398 = arith.select %18, %396, %395 : vector<1x128xi1>, vector<1x128xf32>
    %399 = arith.addf %397, %393 : vector<1x128xf32>
    %cst_58 = arith.constant dense<0.000000e+00> : vector<1x128xf32>
    %400 = tpu.matmul %375, %33, %cst_58 {dimension_numbers = #tpu.dot_dimension_numbers<[1], [0], [0], [1], [0, 0, 1, 1], [], []>} : vector<1x32xf32>, vector<32x128xf32>, vector<1x128xf32> -> vector<1x128xf32>
    %401 = arith.addf %399, %400 : vector<1x128xf32>
    %402 = math.tanh %401 : vector<1x128xf32>
    %cst_59 = arith.constant 5.000000e-01 : f32
    %403 = vector.broadcast %cst_59 : f32 to vector<1x128xf32>
    %404 = arith.mulf %403, %402 : vector<1x128xf32>
    %cst_60 = arith.constant 5.000000e-01 : f32
    %405 = vector.broadcast %cst_60 : f32 to vector<1x128xf32>
    %406 = arith.addf %404, %405 : vector<1x128xf32>
    %407 = arith.select %25, %402, %406 : vector<1x128xi1>, vector<1x128xf32>
    %408 = vector.extract_strided_slice %407 {offsets = [0, 0], sizes = [1, 32], strides = [1, 1]} : vector<1x128xf32> to vector<1x32xf32>
    %409 = vector.extract_strided_slice %407 {offsets = [0, 32], sizes = [1, 32], strides = [1, 1]} : vector<1x128xf32> to vector<1x32xf32>
    %410 = vector.extract_strided_slice %407 {offsets = [0, 64], sizes = [1, 32], strides = [1, 1]} : vector<1x128xf32> to vector<1x32xf32>
    %411 = vector.extract_strided_slice %407 {offsets = [0, 96], sizes = [1, 32], strides = [1, 1]} : vector<1x128xf32> to vector<1x32xf32>
    %412 = arith.mulf %409, %373 : vector<1x32xf32>
    %413 = arith.mulf %408, %410 : vector<1x32xf32>
    %414 = arith.addf %412, %413 : vector<1x32xf32>
    %415 = math.tanh %414 : vector<1x32xf32>
    %416 = arith.mulf %411, %415 : vector<1x32xf32>
    %417 = arith.addf %398, %394 : vector<1x128xf32>
    %cst_61 = arith.constant dense<0.000000e+00> : vector<1x128xf32>
    %418 = tpu.matmul %416, %33, %cst_61 {dimension_numbers = #tpu.dot_dimension_numbers<[1], [0], [0], [1], [0, 0, 1, 1], [], []>} : vector<1x32xf32>, vector<32x128xf32>, vector<1x128xf32> -> vector<1x128xf32>
    %419 = arith.addf %417, %418 : vector<1x128xf32>
    %420 = math.tanh %419 : vector<1x128xf32>
    %cst_62 = arith.constant 5.000000e-01 : f32
    %421 = vector.broadcast %cst_62 : f32 to vector<1x128xf32>
    %422 = arith.mulf %421, %420 : vector<1x128xf32>
    %cst_63 = arith.constant 5.000000e-01 : f32
    %423 = vector.broadcast %cst_63 : f32 to vector<1x128xf32>
    %424 = arith.addf %422, %423 : vector<1x128xf32>
    %425 = arith.select %25, %420, %424 : vector<1x128xi1>, vector<1x128xf32>
    %426 = vector.extract_strided_slice %425 {offsets = [0, 0], sizes = [1, 32], strides = [1, 1]} : vector<1x128xf32> to vector<1x32xf32>
    %427 = vector.extract_strided_slice %425 {offsets = [0, 32], sizes = [1, 32], strides = [1, 1]} : vector<1x128xf32> to vector<1x32xf32>
    %428 = vector.extract_strided_slice %425 {offsets = [0, 64], sizes = [1, 32], strides = [1, 1]} : vector<1x128xf32> to vector<1x32xf32>
    %429 = vector.extract_strided_slice %425 {offsets = [0, 96], sizes = [1, 32], strides = [1, 1]} : vector<1x128xf32> to vector<1x32xf32>
    %430 = arith.mulf %427, %414 : vector<1x32xf32>
    %431 = arith.mulf %426, %428 : vector<1x32xf32>
    %432 = arith.addf %430, %431 : vector<1x32xf32>
    %433 = math.tanh %432 : vector<1x32xf32>
    %434 = arith.mulf %429, %433 : vector<1x32xf32>
    %435 = vector.extract_strided_slice %416 {offsets = [0, 16], sizes = [1, 16], strides = [1, 1]} : vector<1x32xf32> to vector<1x16xf32>
    %436 = vector.extract_strided_slice %434 {offsets = [0, 16], sizes = [1, 16], strides = [1, 1]} : vector<1x32xf32> to vector<1x16xf32>
    %437 = arith.select %28, %435, %436 : vector<1x16xi1>, vector<1x16xf32>
    %438 = vector.extract_strided_slice %434 {offsets = [0, 16], sizes = [1, 16], strides = [1, 1]} : vector<1x32xf32> to vector<1x16xf32>
    %439 = vector.extract_strided_slice %416 {offsets = [0, 16], sizes = [1, 16], strides = [1, 1]} : vector<1x32xf32> to vector<1x16xf32>
    %440 = arith.select %28, %438, %439 : vector<1x16xi1>, vector<1x16xf32>
    %441 = tpu.concatenate %437, %440 in 0 : vector<1x16xf32>, vector<1x16xf32> -> vector<2x16xf32>
    %442 = vector.extract_strided_slice %416 {offsets = [0, 0], sizes = [1, 16], strides = [1, 1]} : vector<1x32xf32> to vector<1x16xf32>
    %443 = vector.extract_strided_slice %434 {offsets = [0, 0], sizes = [1, 16], strides = [1, 1]} : vector<1x32xf32> to vector<1x16xf32>
    %444 = arith.select %28, %442, %443 : vector<1x16xi1>, vector<1x16xf32>
    %445 = vector.extract_strided_slice %434 {offsets = [0, 0], sizes = [1, 16], strides = [1, 1]} : vector<1x32xf32> to vector<1x16xf32>
    %446 = vector.extract_strided_slice %416 {offsets = [0, 0], sizes = [1, 16], strides = [1, 1]} : vector<1x32xf32> to vector<1x16xf32>
    %447 = arith.select %28, %445, %446 : vector<1x16xi1>, vector<1x16xf32>
    %448 = tpu.concatenate %444, %447 in 0 : vector<1x16xf32>, vector<1x16xf32> -> vector<2x16xf32>
    %cst_64 = arith.constant dense<0.000000e+00> : vector<2x128xf32>
    %449 = tpu.matmul %448, %34, %cst_64 {dimension_numbers = #tpu.dot_dimension_numbers<[1], [0], [0], [1], [0, 0, 1, 1], [], []>} : vector<2x16xf32>, vector<16x128xf32>, vector<2x128xf32> -> vector<2x128xf32>
    %450 = vector.extract_strided_slice %449 {offsets = [0, 0], sizes = [1, 128], strides = [1, 1]} : vector<2x128xf32> to vector<1x128xf32>
    %451 = vector.extract_strided_slice %449 {offsets = [1, 0], sizes = [1, 128], strides = [1, 1]} : vector<2x128xf32> to vector<1x128xf32>
    %452 = arith.select %20, %450, %451 : vector<1x128xi1>, vector<1x128xf32>
    %453 = arith.select %20, %451, %450 : vector<1x128xi1>, vector<1x128xf32>
    %454 = vector.extract_strided_slice %41 {offsets = [14, 0], sizes = [1, 128], strides = [1, 1]} : vector<16x128xf32> to vector<1x128xf32>
    %455 = vector.extract_strided_slice %41 {offsets = [15, 0], sizes = [1, 128], strides = [1, 1]} : vector<16x128xf32> to vector<1x128xf32>
    %456 = arith.select %18, %454, %455 : vector<1x128xi1>, vector<1x128xf32>
    %457 = arith.select %18, %455, %454 : vector<1x128xi1>, vector<1x128xf32>
    %458 = arith.addf %456, %452 : vector<1x128xf32>
    %cst_65 = arith.constant dense<0.000000e+00> : vector<1x128xf32>
    %459 = tpu.matmul %434, %33, %cst_65 {dimension_numbers = #tpu.dot_dimension_numbers<[1], [0], [0], [1], [0, 0, 1, 1], [], []>} : vector<1x32xf32>, vector<32x128xf32>, vector<1x128xf32> -> vector<1x128xf32>
    %460 = arith.addf %458, %459 : vector<1x128xf32>
    %461 = math.tanh %460 : vector<1x128xf32>
    %cst_66 = arith.constant 5.000000e-01 : f32
    %462 = vector.broadcast %cst_66 : f32 to vector<1x128xf32>
    %463 = arith.mulf %462, %461 : vector<1x128xf32>
    %cst_67 = arith.constant 5.000000e-01 : f32
    %464 = vector.broadcast %cst_67 : f32 to vector<1x128xf32>
    %465 = arith.addf %463, %464 : vector<1x128xf32>
    %466 = arith.select %25, %461, %465 : vector<1x128xi1>, vector<1x128xf32>
    %467 = vector.extract_strided_slice %466 {offsets = [0, 0], sizes = [1, 32], strides = [1, 1]} : vector<1x128xf32> to vector<1x32xf32>
    %468 = vector.extract_strided_slice %466 {offsets = [0, 32], sizes = [1, 32], strides = [1, 1]} : vector<1x128xf32> to vector<1x32xf32>
    %469 = vector.extract_strided_slice %466 {offsets = [0, 64], sizes = [1, 32], strides = [1, 1]} : vector<1x128xf32> to vector<1x32xf32>
    %470 = vector.extract_strided_slice %466 {offsets = [0, 96], sizes = [1, 32], strides = [1, 1]} : vector<1x128xf32> to vector<1x32xf32>
    %471 = arith.mulf %468, %432 : vector<1x32xf32>
    %472 = arith.mulf %467, %469 : vector<1x32xf32>
    %473 = arith.addf %471, %472 : vector<1x32xf32>
    %474 = math.tanh %473 : vector<1x32xf32>
    %475 = arith.mulf %470, %474 : vector<1x32xf32>
    %476 = arith.addf %457, %453 : vector<1x128xf32>
    %cst_68 = arith.constant dense<0.000000e+00> : vector<1x128xf32>
    %477 = tpu.matmul %475, %33, %cst_68 {dimension_numbers = #tpu.dot_dimension_numbers<[1], [0], [0], [1], [0, 0, 1, 1], [], []>} : vector<1x32xf32>, vector<32x128xf32>, vector<1x128xf32> -> vector<1x128xf32>
    %478 = arith.addf %476, %477 : vector<1x128xf32>
    %479 = math.tanh %478 : vector<1x128xf32>
    %cst_69 = arith.constant 5.000000e-01 : f32
    %480 = vector.broadcast %cst_69 : f32 to vector<1x128xf32>
    %481 = arith.mulf %480, %479 : vector<1x128xf32>
    %cst_70 = arith.constant 5.000000e-01 : f32
    %482 = vector.broadcast %cst_70 : f32 to vector<1x128xf32>
    %483 = arith.addf %481, %482 : vector<1x128xf32>
    %484 = arith.select %25, %479, %483 : vector<1x128xi1>, vector<1x128xf32>
    %485 = vector.extract_strided_slice %484 {offsets = [0, 0], sizes = [1, 32], strides = [1, 1]} : vector<1x128xf32> to vector<1x32xf32>
    %486 = vector.extract_strided_slice %484 {offsets = [0, 32], sizes = [1, 32], strides = [1, 1]} : vector<1x128xf32> to vector<1x32xf32>
    %487 = vector.extract_strided_slice %484 {offsets = [0, 64], sizes = [1, 32], strides = [1, 1]} : vector<1x128xf32> to vector<1x32xf32>
    %488 = vector.extract_strided_slice %484 {offsets = [0, 96], sizes = [1, 32], strides = [1, 1]} : vector<1x128xf32> to vector<1x32xf32>
    %489 = arith.mulf %486, %473 : vector<1x32xf32>
    %490 = arith.mulf %485, %487 : vector<1x32xf32>
    %491 = arith.addf %489, %490 : vector<1x32xf32>
    %492 = math.tanh %491 : vector<1x32xf32>
    %493 = arith.mulf %488, %492 : vector<1x32xf32>
    %494 = vector.extract_strided_slice %475 {offsets = [0, 16], sizes = [1, 16], strides = [1, 1]} : vector<1x32xf32> to vector<1x16xf32>
    %495 = vector.extract_strided_slice %493 {offsets = [0, 16], sizes = [1, 16], strides = [1, 1]} : vector<1x32xf32> to vector<1x16xf32>
    %496 = arith.select %28, %494, %495 : vector<1x16xi1>, vector<1x16xf32>
    %497 = vector.extract_strided_slice %493 {offsets = [0, 16], sizes = [1, 16], strides = [1, 1]} : vector<1x32xf32> to vector<1x16xf32>
    %498 = vector.extract_strided_slice %475 {offsets = [0, 16], sizes = [1, 16], strides = [1, 1]} : vector<1x32xf32> to vector<1x16xf32>
    %499 = arith.select %28, %497, %498 : vector<1x16xi1>, vector<1x16xf32>
    %500 = tpu.concatenate %496, %499 in 0 : vector<1x16xf32>, vector<1x16xf32> -> vector<2x16xf32>
    %501 = vector.extract_strided_slice %475 {offsets = [0, 0], sizes = [1, 16], strides = [1, 1]} : vector<1x32xf32> to vector<1x16xf32>
    %502 = vector.extract_strided_slice %493 {offsets = [0, 0], sizes = [1, 16], strides = [1, 1]} : vector<1x32xf32> to vector<1x16xf32>
    %503 = arith.select %28, %501, %502 : vector<1x16xi1>, vector<1x16xf32>
    %504 = vector.extract_strided_slice %493 {offsets = [0, 0], sizes = [1, 16], strides = [1, 1]} : vector<1x32xf32> to vector<1x16xf32>
    %505 = vector.extract_strided_slice %475 {offsets = [0, 0], sizes = [1, 16], strides = [1, 1]} : vector<1x32xf32> to vector<1x16xf32>
    %506 = arith.select %28, %504, %505 : vector<1x16xi1>, vector<1x16xf32>
    %507 = tpu.concatenate %503, %506 in 0 : vector<1x16xf32>, vector<1x16xf32> -> vector<2x16xf32>
    %cst_71 = arith.constant dense<0.000000e+00> : vector<2x128xf32>
    %508 = tpu.matmul %507, %34, %cst_71 {dimension_numbers = #tpu.dot_dimension_numbers<[1], [0], [0], [1], [0, 0, 1, 1], [], []>} : vector<2x16xf32>, vector<16x128xf32>, vector<2x128xf32> -> vector<2x128xf32>
    %509 = vector.extract_strided_slice %508 {offsets = [0, 0], sizes = [1, 128], strides = [1, 1]} : vector<2x128xf32> to vector<1x128xf32>
    %510 = vector.extract_strided_slice %508 {offsets = [1, 0], sizes = [1, 128], strides = [1, 1]} : vector<2x128xf32> to vector<1x128xf32>
    %511 = arith.select %20, %509, %510 : vector<1x128xi1>, vector<1x128xf32>
    %512 = arith.select %20, %510, %509 : vector<1x128xi1>, vector<1x128xf32>
    %513 = arith.addf %35, %511 : vector<1x128xf32>
    %cst_72 = arith.constant dense<0.000000e+00> : vector<1x128xf32>
    %514 = tpu.matmul %493, %33, %cst_72 {dimension_numbers = #tpu.dot_dimension_numbers<[1], [0], [0], [1], [0, 0, 1, 1], [], []>} : vector<1x32xf32>, vector<32x128xf32>, vector<1x128xf32> -> vector<1x128xf32>
    %515 = arith.addf %513, %514 : vector<1x128xf32>
    %516 = math.tanh %515 : vector<1x128xf32>
    %cst_73 = arith.constant 5.000000e-01 : f32
    %517 = vector.broadcast %cst_73 : f32 to vector<1x128xf32>
    %518 = arith.mulf %517, %516 : vector<1x128xf32>
    %cst_74 = arith.constant 5.000000e-01 : f32
    %519 = vector.broadcast %cst_74 : f32 to vector<1x128xf32>
    %520 = arith.addf %518, %519 : vector<1x128xf32>
    %521 = arith.select %25, %516, %520 : vector<1x128xi1>, vector<1x128xf32>
    %522 = vector.extract_strided_slice %521 {offsets = [0, 0], sizes = [1, 32], strides = [1, 1]} : vector<1x128xf32> to vector<1x32xf32>
    %523 = vector.extract_strided_slice %521 {offsets = [0, 32], sizes = [1, 32], strides = [1, 1]} : vector<1x128xf32> to vector<1x32xf32>
    %524 = vector.extract_strided_slice %521 {offsets = [0, 64], sizes = [1, 32], strides = [1, 1]} : vector<1x128xf32> to vector<1x32xf32>
    %525 = vector.extract_strided_slice %521 {offsets = [0, 96], sizes = [1, 32], strides = [1, 1]} : vector<1x128xf32> to vector<1x32xf32>
    %526 = arith.mulf %523, %491 : vector<1x32xf32>
    %527 = arith.mulf %522, %524 : vector<1x32xf32>
    %528 = arith.addf %526, %527 : vector<1x32xf32>
    %529 = math.tanh %528 : vector<1x32xf32>
    %530 = arith.mulf %525, %529 : vector<1x32xf32>
    %531 = arith.addf %35, %512 : vector<1x128xf32>
    %cst_75 = arith.constant dense<0.000000e+00> : vector<1x128xf32>
    %532 = tpu.matmul %530, %33, %cst_75 {dimension_numbers = #tpu.dot_dimension_numbers<[1], [0], [0], [1], [0, 0, 1, 1], [], []>} : vector<1x32xf32>, vector<32x128xf32>, vector<1x128xf32> -> vector<1x128xf32>
    %533 = arith.addf %531, %532 : vector<1x128xf32>
    %534 = math.tanh %533 : vector<1x128xf32>
    %cst_76 = arith.constant 5.000000e-01 : f32
    %535 = vector.broadcast %cst_76 : f32 to vector<1x128xf32>
    %536 = arith.mulf %535, %534 : vector<1x128xf32>
    %cst_77 = arith.constant 5.000000e-01 : f32
    %537 = vector.broadcast %cst_77 : f32 to vector<1x128xf32>
    %538 = arith.addf %536, %537 : vector<1x128xf32>
    %539 = arith.select %25, %534, %538 : vector<1x128xi1>, vector<1x128xf32>
    %540 = vector.extract_strided_slice %539 {offsets = [0, 0], sizes = [1, 32], strides = [1, 1]} : vector<1x128xf32> to vector<1x32xf32>
    %541 = vector.extract_strided_slice %539 {offsets = [0, 32], sizes = [1, 32], strides = [1, 1]} : vector<1x128xf32> to vector<1x32xf32>
    %542 = vector.extract_strided_slice %539 {offsets = [0, 64], sizes = [1, 32], strides = [1, 1]} : vector<1x128xf32> to vector<1x32xf32>
    %543 = vector.extract_strided_slice %539 {offsets = [0, 96], sizes = [1, 32], strides = [1, 1]} : vector<1x128xf32> to vector<1x32xf32>
    %544 = arith.mulf %541, %528 : vector<1x32xf32>
    %545 = arith.mulf %540, %542 : vector<1x32xf32>
    %546 = arith.addf %544, %545 : vector<1x32xf32>
    %547 = math.tanh %546 : vector<1x32xf32>
    %548 = arith.mulf %543, %547 : vector<1x32xf32>
    %549 = vector.extract_strided_slice %530 {offsets = [0, 16], sizes = [1, 16], strides = [1, 1]} : vector<1x32xf32> to vector<1x16xf32>
    %550 = vector.extract_strided_slice %548 {offsets = [0, 16], sizes = [1, 16], strides = [1, 1]} : vector<1x32xf32> to vector<1x16xf32>
    %551 = arith.select %28, %549, %550 : vector<1x16xi1>, vector<1x16xf32>
    %552 = vector.extract_strided_slice %548 {offsets = [0, 16], sizes = [1, 16], strides = [1, 1]} : vector<1x32xf32> to vector<1x16xf32>
    %553 = vector.extract_strided_slice %530 {offsets = [0, 16], sizes = [1, 16], strides = [1, 1]} : vector<1x32xf32> to vector<1x16xf32>
    %554 = arith.select %28, %552, %553 : vector<1x16xi1>, vector<1x16xf32>
    %555 = tpu.concatenate %551, %554 in 0 : vector<1x16xf32>, vector<1x16xf32> -> vector<2x16xf32>
    %556 = tpu.concatenate %146, %205, %264, %323, %382, %441, %500, %555 in 0 : vector<2x16xf32>, vector<2x16xf32>, vector<2x16xf32>, vector<2x16xf32>, vector<2x16xf32>, vector<2x16xf32>, vector<2x16xf32>, vector<2x16xf32> -> vector<16x16xf32>
    %cst_78 = arith.constant dense<0.000000e+00> : vector<16x128xf32>
    %557 = tpu.matmul %556, %36, %cst_78 {dimension_numbers = #tpu.dot_dimension_numbers<[0], [0], [1], [1], [0, 1, 1, 1], [], []>} : vector<16x16xf32>, vector<16x128xf32>, vector<16x128xf32> -> vector<16x128xf32>
    %558 = vector.broadcast %37 : vector<1x128xf32> to vector<16x128xf32>
    %559 = arith.addf %557, %558 : vector<16x128xf32>
    %560 = vector.extract_strided_slice %559 {offsets = [0, 0], sizes = [16, 4], strides = [1, 1]} : vector<16x128xf32> to vector<16x4xf32>
    %c0_79 = arith.constant 0 : index
    %c0_80 = arith.constant 0 : index
    %561 = vector.load %arg3[%c0_79, %c0_80] : memref<16x4xf32, #tpu.memory_space<vmem>>, vector<16x4xf32>
    tpu.vector_store %arg3[%c0_79, %c0_80], %560 {strides = array<i32>} : memref<16x4xf32, #tpu.memory_space<vmem>>, vector<16x4xf32>,
    return
  }
  func.func @transform_0(%arg0: i32) -> (i32, i32) {
    %c0_i32 = arith.constant 0 : i32
    %c0_i32_0 = arith.constant 0 : i32
    %c0_i32_1 = arith.constant 0 : i32
    return %c0_i32, %c0_i32_0 : i32, i32
  }
  func.func @transform_1(%arg0: i32) -> (i32, i32) {
    %c0_i32 = arith.constant 0 : i32
    %c0_i32_0 = arith.constant 0 : i32
    %c0_i32_1 = arith.constant 0 : i32
    return %c0_i32, %c0_i32_0 : i32, i32
  }
  func.func @transform_2(%arg0: i32) -> (i32, i32) {
    %c0_i32 = arith.constant 0 : i32
    %c0_i32_0 = arith.constant 0 : i32
    %c0_i32_1 = arith.constant 0 : i32
    return %c0_i32, %c0_i32_0 : i32, i32
  }
}

</mosaic_0001>

<llo_original>
// kernel: tpu_custom_call.1
$region0: #{tpu_custom_call.1}
  #allocation0 [shape = 'u32[]', space=smem, size = 0x4, offset = 0x4, fixed_abs, tag = 'smem constant byte address 0x4 - core index']
  #allocation1 [shape = 'u32[72,128]{1,0:T(1,128)}', space=vmem, size = 0x9000, scoped, tag = 'internal scratch']
  %s0 = inlined_call_operand.vmem [shape: f32[16,8], index: 0, kind: input, shape index: {}]
  %s1 = inlined_call_operand.hbm [shape: f32[88,128], index: 1, kind: input, shape index: {}]
  %s2 = inlined_call_operand.vmem [shape: f32[16,4], index: 2, kind: output, shape index: {}]
  %s3 = sld [smem:[#allocation0]]
  $region22: #{tpu_custom_call.1} parent=0
    _
  %s5 = ssub.s32 1, %s3
  %s6 = scalar_select 0, %s5, %s3
  $region1: #{tpu_custom_call.1} parent=0
    #allocation2 [shape = 'u8[45056]{0}', space=vmem, size = 0xb000, scoped, tag = 'input window, operand 1, single buffered']
    #allocation3 [shape = 's32[1]{0}', space=sflag, size = 0x4, scoped, tag = 'scoped memory for tpu_custom_call.1']
    %7 = vsyncpa [#allocation3], 0
    // Predicated region
    $region2: #{tpu_custom_call.1} parent=1 // pred_check
      _
    $region3: #{tpu_custom_call.1} parent=1 // pred_check_branch
      %9 = sbr.rel (0) target = $region5
    $region4: #{tpu_custom_call.1} parent=1 // pred_region
      _
    $region5: #{tpu_custom_call.1} parent=1 // pred_fallthru
      _
    // Predicated region
    $region6: #{tpu_custom_call.1} parent=1 // pred_check
      _
    $region7: #{tpu_custom_call.1} parent=1 // pred_check_branch
      %11 = sbr.rel (0) target = $region9
    $region8: #{tpu_custom_call.1} parent=1 // pred_region
      %13 = vsyncadd [#allocation3], 0
      %s14 = sshll.u32 %s1, 4
      %s15 = int_to_ptr.hbm [resolvable:$true] %s14
      %s16 = sshll.u32 [#allocation2], 4
      %s17 = int_to_ptr.vmem [resolvable:$true] %s16
      %22 = dma.hbm_to_vmem [thread:$0]  %s15, 1408, %s17, [#allocation3], 128, 128, 8
    $region9: #{tpu_custom_call.1} parent=1 // pred_fallthru
      _
    // Predicated region
    $region10: #{tpu_custom_call.1} parent=1 // pred_check
      _
    $region11: #{tpu_custom_call.1} parent=1 // pred_check_branch
      %24 = sbr.rel (0) target = $region13
    $region12: #{tpu_custom_call.1} parent=1 // pred_region
      %26 = dma.done [#allocation3], 1408
    $region13: #{tpu_custom_call.1} parent=1 // pred_fallthru
      _
    %v27 = vlaneseq
    %v28 = vand.u32 %v27, 127
    %vm29 = vcmp.lt.s32.totalorder %v28, 0
    %v30 = vsub.s32 0, %v28
    %v31 = vsel %vm29, %v30, %v28
    %v32 = vshrl.u32 %v31, 5
    %v33 = vand.u32 %v31, 31
    %v34 = vsub.s32 0, %v33
    %v35 = vsel %vm29, %v34, %v33
    %vm36 = vcmp.ne.s32.totalorder %v35, 0
    %vm37 = vcmp.lt.s32.totalorder %v35, 0
    %vm38 = vmand %vm37, %vm36
    %v39 = vadd.s32 %v35, 32
    %v40 = vsel %vm38, %v39, %v35
    %vm41 = vcmp.lt.s32.totalorder %v40, 8
    %vm42 = vcmp.lt.s32.totalorder %v40, 24
    %vm43 = vcmp.ge.s32.totalorder %v28, 64
    %vm44 = vcmp.lt.s32.totalorder %v28, 96
    %vm45 = vmand %vm43, %vm44
    %vm46 = vcmp.lt.s32.totalorder %v28, 8
    %vm47 = vcmp.lt.s32.totalorder %v28, 16
    %v48 = vld [vmem:[#allocation2] sm:$0xff]
    %v49 = vld [vmem:[#allocation2 + $0x8] sm:$0xff]
    %v50 = vld [vmem:[#allocation2 + $0x10] sm:$0xff]
    %v51 = vld [vmem:[#allocation2 + $0x18] sm:$0xff]
    %v52 = vld [vmem:[#allocation2 + $0x20] sm:$0xff]
    %v53 = vld [vmem:[#allocation2 + $0x28] sm:$0xff]
    %v54 = vld [vmem:[#allocation2 + $0x30] sm:$0xff]
    %v55 = vld [vmem:[#allocation2 + $0x38] sm:$0x1]
    %v56 = vld [vmem:[#allocation2 + $0x40] sm:$0xff]
    %v57 = vld [vmem:[#allocation2 + $0x48] sm:$0xff]
    %v58 = vld [vmem:[#allocation2 + $0x50] sm:$0x1]
    %v59 = vld [vmem:[%s0] sm:$0xff]
    %v60 = vld [vmem:[%s0 + $0x8] sm:$0xff]
    %v61 = vperm.slane %v55, 0
    %vm62 = vcmask 64512
    %v64 = vsel %vm62, %v59, 0
    %v67 = vsel %vm62, %v60, 0
    %69 = vmatpush.msra.mxu0 0.0
    %70 = vmatpush.msra.mxu0 0.0
    %71 = vmatpush.msra.mxu0 0.0
    %72 = vmatpush.msra.mxu0 0.0
    %73 = vmatpush.msra.mxu0 0.0
    %74 = vmatpush.msra.mxu0 0.0
    %75 = vmatpush.msra.mxu0 0.0
    %76 = vmatpush.msra.mxu0 0.0
    %77 = vmatpush.msra.mxu0 0.0
    %78 = vmatpush.msra.mxu0 0.0
    %79 = vmatpush.msra.mxu0 0.0
    %80 = vmatpush.msra.mxu0 0.0
    %81 = vmatpush.msra.mxu0 0.0
    %82 = vmatpush.msra.mxu0 0.0
    %83 = vmatpush.msra.mxu0 0.0
    %84 = vmatpush.msra.mxu0 %v48
    %85 = vmatmul.f32.gmra.mxu0 %v64
    %v86 = vpop.f32.mrf.mxu0
    %v87 = vadd.f32 %v61, %v86
    %88 = vmatmul.f32.gmra.mxu0 %v67
    %v89 = vpop.f32.mrf.mxu0
    %v90 = vadd.f32 %v61, %v89
    %91 = vdwg.mxu0
    %v93 = vrot.slane %v87, 1
    %v95 = vsel %vm41, %v87, %v93
    %v96 = vrot.slane %v87, 7
    %v98 = vsel %vm41, %v87, %v96
    %v99 = vadd.f32 %v95, 0.0
    %vm100 = vcmask 261120
    %v102 = vsel %vm100, 0.0, 0
    %104 = vmatpush.msra.mxu0 0.0
    %105 = vmatpush.msra.mxu0 0.0
    %106 = vmatpush.msra.mxu0 0.0
    %107 = vmatpush.msra.mxu0 0.0
    %108 = vmatpush.msra.mxu0 0.0
    %109 = vmatpush.msra.mxu0 0.0
    %110 = vmatpush.msra.mxu0 0.0
    %111 = vmatpush.msra.mxu0 0.0
    %112 = vmatpush.msra.mxu0 0.0
    %113 = vmatpush.msra.mxu0 0.0
    %114 = vmatpush.msra.mxu0 0.0
    %115 = vmatpush.msra.mxu0 0.0
    %116 = vmatpush.msra.mxu0 %v52
    %117 = vmatpush.msra.mxu0 %v51
    %118 = vmatpush.msra.mxu0 %v50
    %119 = vmatpush.msra.mxu0 %v49
    %120 = vmatmul.f32.gmra.mxu0 %v102
    %v121 = vpop.f32.mrf.mxu0
    %v122 = vadd.f32 0.0, %v121
    %123 = vdwg.mxu0
    %v124 = vadd.f32 %v99, %v122
    %v125 = vtanh.pop %v124
    %v126 = vmul.f32 %v125, 0.5
    %v127 = vadd.f32 %v126, 0.5
    %v128 = vsel %vm45, %v125, %v127
    %v129 = vmul.f32 %v128, 0.0
    %131 = vrot.lane.b32.xlu0 %v128, 64
    %v132 = vpop.permute.xlu0 %131
    %v134 = vmul.f32 %v128, %v132
    %136 = vrot.lane.b32.xlu0 %v134, 32
    %v137 = vpop.permute.xlu0 %136
    %v139 = vadd.f32 %v129, %v137
    %v140 = vtanh.pop %v139
    %142 = vrot.lane.b32.xlu0 %v140, 64
    %v143 = vpop.permute.xlu0 %142
    %v145 = vmul.f32 %v128, %v143
    %v146 = vadd.f32 %v98, 0.0
    %148 = vrot.lane.b32.xlu0 %v145, 32
    %v149 = vpop.permute.xlu0 %148
    %v150 = vsel %vm100, %v149, 0
    %152 = vmatpush.msra.mxu0 0.0
    %153 = vmatpush.msra.mxu0 0.0
    %154 = vmatpush.msra.mxu0 0.0
    %155 = vmatpush.msra.mxu0 0.0
    %156 = vmatpush.msra.mxu0 0.0
    %157 = vmatpush.msra.mxu0 0.0
    %158 = vmatpush.msra.mxu0 0.0
    %159 = vmatpush.msra.mxu0 0.0
    %160 = vmatpush.msra.mxu0 0.0
    %161 = vmatpush.msra.mxu0 0.0
    %162 = vmatpush.msra.mxu0 0.0
    %163 = vmatpush.msra.mxu0 0.0
    %164 = vmatpush.msra.mxu0 %v52
    %165 = vmatpush.msra.mxu0 %v51
    %166 = vmatpush.msra.mxu0 %v50
    %167 = vmatpush.msra.mxu0 %v49
    %168 = vmatmul.f32.gmra.mxu0 %v150
    %v169 = vpop.f32.mrf.mxu0
    %v170 = vadd.f32 0.0, %v169
    %171 = vdwg.mxu0
    %v173 = vrot.slane %v170, 7
    %v175 = vadd.f32 %v146, %v173
    %v176 = vtanh.pop %v175
    %v177 = vmul.f32 %v176, 0.5
    %v178 = vadd.f32 %v177, 0.5
    %v179 = vsel %vm45, %v176, %v178
    %v181 = vrot.slane %v139, 7
    %v183 = vmul.f32 %v179, %v181
    %185 = vrot.lane.b32.xlu0 %v179, 64
    %v186 = vpop.permute.xlu0 %185
    %v188 = vmul.f32 %v179, %v186
    %190 = vrot.lane.b32.xlu0 %v188, 32
    %v191 = vpop.permute.xlu0 %190
    %v193 = vadd.f32 %v183, %v191
    %v194 = vtanh.pop %v193
    %196 = vrot.lane.b32.xlu0 %v194, 64
    %v197 = vpop.permute.xlu0 %196
    %v199 = vmul.f32 %v179, %v197
    %v201 = vrot.slane %v199, 1
    %202 = vrot.lane.b32.xlu0 %v201, 32
    %v203 = vpop.permute.xlu0 %202
    %v205 = vsel %vm47, %v203, 0.0
    %v207 = vrot.slane %v193, 1
    %208 = vrot.lane.b32.xlu0 %v207, 96
    %v209 = vpop.permute.xlu0 %208
    %v211 = vsel %vm47, %v209, 0.0
    %v213 = vsel %vm46, %v149, %v203
    %v214 = vsel %vm46, %v203, %v149
    %v216 = vrot.slane %v214, 7
    %vm218 = vcmask 1040384
    %v219 = vsel %vm218, %v213, %v216
    %vm220 = vcmask 130048
    %v222 = vsel %vm220, %v219, 0
    %224 = vmatpush.msra.mxu0 0.0
    %225 = vmatpush.msra.mxu0 0.0
    %226 = vmatpush.msra.mxu0 0.0
    %227 = vmatpush.msra.mxu0 0.0
    %228 = vmatpush.msra.mxu0 0.0
    %229 = vmatpush.msra.mxu0 0.0
    %230 = vmatpush.msra.mxu0 0.0
    %231 = vmatpush.msra.mxu0 0.0
    %232 = vmatpush.msra.mxu0 0.0
    %233 = vmatpush.msra.mxu0 0.0
    %234 = vmatpush.msra.mxu0 0.0
    %235 = vmatpush.msra.mxu0 0.0
    %236 = vmatpush.msra.mxu0 0.0
    %237 = vmatpush.msra.mxu0 0.0
    %238 = vmatpush.msra.mxu0 %v54
    %239 = vmatpush.msra.mxu0 %v53
    %240 = vmatmul.f32.gmra.mxu0 %v222
    %v241 = vpop.f32.mrf.mxu0
    %v242 = vadd.f32 0.0, %v241
    %243 = vdwg.mxu0
    %v245 = vrot.slane %v242, 1
    %v247 = vsel %vm42, %v242, %v245
    %v248 = vrot.slane %v242, 7
    %v250 = vsel %vm42, %v242, %v248
    %v252 = vrot.slane %v247, 6
    %v254 = vadd.f32 %v95, %v252
    %v256 = vsel %vm100, %v205, 0
    %258 = vmatpush.msra.mxu0 0.0
    %259 = vmatpush.msra.mxu0 0.0
    %260 = vmatpush.msra.mxu0 0.0
    %261 = vmatpush.msra.mxu0 0.0
    %262 = vmatpush.msra.mxu0 0.0
    %263 = vmatpush.msra.mxu0 0.0
    %264 = vmatpush.msra.mxu0 0.0
    %265 = vmatpush.msra.mxu0 0.0
    %266 = vmatpush.msra.mxu0 0.0
    %267 = vmatpush.msra.mxu0 0.0
    %268 = vmatpush.msra.mxu0 0.0
    %269 = vmatpush.msra.mxu0 0.0
    %270 = vmatpush.msra.mxu0 %v52
    %271 = vmatpush.msra.mxu0 %v51
    %272 = vmatpush.msra.mxu0 %v50
    %273 = vmatpush.msra.mxu0 %v49
    %274 = vmatmul.f32.gmra.mxu0 %v256
    %v275 = vpop.f32.mrf.mxu0
    %v276 = vadd.f32 0.0, %v275
    %277 = vdwg.mxu0
    %v279 = vrot.slane %v276, 6
    %v281 = vadd.f32 %v254, %v279
    %v282 = vtanh.pop %v281
    %v283 = vmul.f32 %v282, 0.5
    %v284 = vadd.f32 %v283, 0.5
    %v285 = vsel %vm45, %v282, %v284
    %v287 = vrot.slane %v211, 6
    %288 = vrot.lane.b32.xlu0 %v287, 32
    %v289 = vpop.permute.xlu0 %288
    %v291 = vmul.f32 %v285, %v289
    %293 = vrot.lane.b32.xlu0 %v285, 64
    %v294 = vpop.permute.xlu0 %293
    %v296 = vmul.f32 %v285, %v294
    %298 = vrot.lane.b32.xlu0 %v296, 32
    %v299 = vpop.permute.xlu0 %298
    %v301 = vadd.f32 %v291, %v299
    %v302 = vtanh.pop %v301
    %304 = vrot.lane.b32.xlu0 %v302, 64
    %v305 = vpop.permute.xlu0 %304
    %v307 = vmul.f32 %v285, %v305
    %v309 = vrot.slane %v250, 6
    %v311 = vadd.f32 %v98, %v309
    %v313 = vrot.slane %v307, 2
    %314 = vrot.lane.b32.xlu0 %v313, 32
    %v315 = vpop.permute.xlu0 %314
    %v316 = vsel %vm100, %v315, 0
    %318 = vmatpush.msra.mxu0 0.0
    %319 = vmatpush.msra.mxu0 0.0
    %320 = vmatpush.msra.mxu0 0.0
    %321 = vmatpush.msra.mxu0 0.0
    %322 = vmatpush.msra.mxu0 0.0
    %323 = vmatpush.msra.mxu0 0.0
    %324 = vmatpush.msra.mxu0 0.0
    %325 = vmatpush.msra.mxu0 0.0
    %326 = vmatpush.msra.mxu0 0.0
    %327 = vmatpush.msra.mxu0 0.0
    %328 = vmatpush.msra.mxu0 0.0
    %329 = vmatpush.msra.mxu0 0.0
    %330 = vmatpush.msra.mxu0 %v52
    %331 = vmatpush.msra.mxu0 %v51
    %332 = vmatpush.msra.mxu0 %v50
    %333 = vmatpush.msra.mxu0 %v49
    %334 = vmatmul.f32.gmra.mxu0 %v316
    %v335 = vpop.f32.mrf.mxu0
    %v336 = vadd.f32 0.0, %v335
    %337 = vdwg.mxu0
    %v339 = vrot.slane %v336, 5
    %v341 = vadd.f32 %v311, %v339
    %v342 = vtanh.pop %v341
    %v343 = vmul.f32 %v342, 0.5
    %v344 = vadd.f32 %v343, 0.5
    %v345 = vsel %vm45, %v342, %v344
    %v347 = vrot.slane %v301, 7
    %v349 = vmul.f32 %v345, %v347
    %351 = vrot.lane.b32.xlu0 %v345, 64
    %v352 = vpop.permute.xlu0 %351
    %v354 = vmul.f32 %v345, %v352
    %356 = vrot.lane.b32.xlu0 %v354, 32
    %v357 = vpop.permute.xlu0 %356
    %v359 = vadd.f32 %v349, %v357
    %v360 = vtanh.pop %v359
    %362 = vrot.lane.b32.xlu0 %v360, 64
    %v363 = vpop.permute.xlu0 %362
    %v365 = vmul.f32 %v345, %v363
    %366 = vrot.lane.b32.xlu0 %v313, 16
    %v367 = vpop.permute.xlu0 %366
    %v370 = vrot.slane %v365, 3
    %371 = vrot.lane.b32.xlu0 %v370, 16
    %v372 = vpop.permute.xlu0 %371
    %v374 = vsel %vm46, %v367, %v372
    %v375 = vsel %vm46, %v372, %v367
    %v377 = vrot.slane %v375, 7
    %v379 = vsel %vm218, %v374, %v377
    %381 = vrot.lane.b32.xlu0 %v370, 32
    %v382 = vpop.permute.xlu0 %381
    %v384 = vsel %vm46, %v315, %v382
    %v385 = vsel %vm46, %v382, %v315
    %v387 = vrot.slane %v385, 7
    %v389 = vsel %vm218, %v384, %v387
    %v391 = vsel %vm220, %v389, 0
    %393 = vmatpush.msra.mxu0 0.0
    %394 = vmatpush.msra.mxu0 0.0
    %395 = vmatpush.msra.mxu0 0.0
    %396 = vmatpush.msra.mxu0 0.0
    %397 = vmatpush.msra.mxu0 0.0
    %398 = vmatpush.msra.mxu0 0.0
    %399 = vmatpush.msra.mxu0 0.0
    %400 = vmatpush.msra.mxu0 0.0
    %401 = vmatpush.msra.mxu0 0.0
    %402 = vmatpush.msra.mxu0 0.0
    %403 = vmatpush.msra.mxu0 0.0
    %404 = vmatpush.msra.mxu0 0.0
    %405 = vmatpush.msra.mxu0 0.0
    %406 = vmatpush.msra.mxu0 0.0
    %407 = vmatpush.msra.mxu0 %v54
    %408 = vmatpush.msra.mxu0 %v53
    %409 = vmatmul.f32.gmra.mxu0 %v391
    %v410 = vpop.f32.mrf.mxu0
    %v411 = vadd.f32 0.0, %v410
    %412 = vdwg.mxu0
    %v414 = vrot.slane %v411, 1
    %v416 = vsel %vm42, %v411, %v414
    %v417 = vrot.slane %v411, 7
    %v419 = vsel %vm42, %v411, %v417
    %v421 = vrot.slane %v416, 4
    %v423 = vadd.f32 %v95, %v421
    %v424 = vsel %vm100, %v382, 0
    %426 = vmatpush.msra.mxu0 0.0
    %427 = vmatpush.msra.mxu0 0.0
    %428 = vmatpush.msra.mxu0 0.0
    %429 = vmatpush.msra.mxu0 0.0
    %430 = vmatpush.msra.mxu0 0.0
    %431 = vmatpush.msra.mxu0 0.0
    %432 = vmatpush.msra.mxu0 0.0
    %433 = vmatpush.msra.mxu0 0.0
    %434 = vmatpush.msra.mxu0 0.0
    %435 = vmatpush.msra.mxu0 0.0
    %436 = vmatpush.msra.mxu0 0.0
    %437 = vmatpush.msra.mxu0 0.0
    %438 = vmatpush.msra.mxu0 %v52
    %439 = vmatpush.msra.mxu0 %v51
    %440 = vmatpush.msra.mxu0 %v50
    %441 = vmatpush.msra.mxu0 %v49
    %442 = vmatmul.f32.gmra.mxu0 %v424
    %v443 = vpop.f32.mrf.mxu0
    %v444 = vadd.f32 0.0, %v443
    %445 = vdwg.mxu0
    %v447 = vrot.slane %v444, 4
    %v449 = vadd.f32 %v423, %v447
    %v450 = vtanh.pop %v449
    %v451 = vmul.f32 %v450, 0.5
    %v452 = vadd.f32 %v451, 0.5
    %v453 = vsel %vm45, %v450, %v452
    %v455 = vrot.slane %v359, 7
    %v457 = vmul.f32 %v453, %v455
    %459 = vrot.lane.b32.xlu0 %v453, 64
    %v460 = vpop.permute.xlu0 %459
    %v462 = vmul.f32 %v453, %v460
    %464 = vrot.lane.b32.xlu0 %v462, 32
    %v465 = vpop.permute.xlu0 %464
    %v467 = vadd.f32 %v457, %v465
    %v468 = vtanh.pop %v467
    %470 = vrot.lane.b32.xlu0 %v468, 64
    %v471 = vpop.permute.xlu0 %470
    %v473 = vmul.f32 %v453, %v471
    %v475 = vrot.slane %v419, 4
    %v477 = vadd.f32 %v98, %v475
    %v479 = vrot.slane %v473, 4
    %480 = vrot.lane.b32.xlu0 %v479, 32
    %v481 = vpop.permute.xlu0 %480
    %v482 = vsel %vm100, %v481, 0
    %484 = vmatpush.msra.mxu0 0.0
    %485 = vmatpush.msra.mxu0 0.0
    %486 = vmatpush.msra.mxu0 0.0
    %487 = vmatpush.msra.mxu0 0.0
    %488 = vmatpush.msra.mxu0 0.0
    %489 = vmatpush.msra.mxu0 0.0
    %490 = vmatpush.msra.mxu0 0.0
    %491 = vmatpush.msra.mxu0 0.0
    %492 = vmatpush.msra.mxu0 0.0
    %493 = vmatpush.msra.mxu0 0.0
    %494 = vmatpush.msra.mxu0 0.0
    %495 = vmatpush.msra.mxu0 0.0
    %496 = vmatpush.msra.mxu0 %v52
    %497 = vmatpush.msra.mxu0 %v51
    %498 = vmatpush.msra.mxu0 %v50
    %499 = vmatpush.msra.mxu0 %v49
    %500 = vmatmul.f32.gmra.mxu0 %v482
    %v501 = vpop.f32.mrf.mxu0
    %v502 = vadd.f32 0.0, %v501
    %503 = vdwg.mxu0
    %v505 = vrot.slane %v502, 3
    %v507 = vadd.f32 %v477, %v505
    %v508 = vtanh.pop %v507
    %v509 = vmul.f32 %v508, 0.5
    %v510 = vadd.f32 %v509, 0.5
    %v511 = vsel %vm45, %v508, %v510
    %v513 = vrot.slane %v467, 7
    %v515 = vmul.f32 %v511, %v513
    %517 = vrot.lane.b32.xlu0 %v511, 64
    %v518 = vpop.permute.xlu0 %517
    %v520 = vmul.f32 %v511, %v518
    %522 = vrot.lane.b32.xlu0 %v520, 32
    %v523 = vpop.permute.xlu0 %522
    %v525 = vadd.f32 %v515, %v523
    %v526 = vtanh.pop %v525
    %528 = vrot.lane.b32.xlu0 %v526, 64
    %v529 = vpop.permute.xlu0 %528
    %v531 = vmul.f32 %v511, %v529
    %532 = vrot.lane.b32.xlu0 %v479, 16
    %v533 = vpop.permute.xlu0 %532
    %v536 = vrot.slane %v531, 5
    %537 = vrot.lane.b32.xlu0 %v536, 16
    %v538 = vpop.permute.xlu0 %537
    %v540 = vsel %vm46, %v533, %v538
    %v541 = vsel %vm46, %v538, %v533
    %v543 = vrot.slane %v541, 7
    %v545 = vsel %vm218, %v540, %v543
    %547 = vrot.lane.b32.xlu0 %v536, 32
    %v548 = vpop.permute.xlu0 %547
    %v550 = vsel %vm46, %v481, %v548
    %v551 = vsel %vm46, %v548, %v481
    %v553 = vrot.slane %v551, 7
    %v555 = vsel %vm218, %v550, %v553
    %v557 = vsel %vm220, %v555, 0
    %559 = vmatpush.msra.mxu0 0.0
    %560 = vmatpush.msra.mxu0 0.0
    %561 = vmatpush.msra.mxu0 0.0
    %562 = vmatpush.msra.mxu0 0.0
    %563 = vmatpush.msra.mxu0 0.0
    %564 = vmatpush.msra.mxu0 0.0
    %565 = vmatpush.msra.mxu0 0.0
    %566 = vmatpush.msra.mxu0 0.0
    %567 = vmatpush.msra.mxu0 0.0
    %568 = vmatpush.msra.mxu0 0.0
    %569 = vmatpush.msra.mxu0 0.0
    %570 = vmatpush.msra.mxu0 0.0
    %571 = vmatpush.msra.mxu0 0.0
    %572 = vmatpush.msra.mxu0 0.0
    %573 = vmatpush.msra.mxu0 %v54
    %574 = vmatpush.msra.mxu0 %v53
    %575 = vmatmul.f32.gmra.mxu0 %v557
    %v576 = vpop.f32.mrf.mxu0
    %v577 = vadd.f32 0.0, %v576
    %578 = vdwg.mxu0
    %v580 = vrot.slane %v577, 1
    %v582 = vsel %vm42, %v577, %v580
    %v583 = vrot.slane %v577, 7
    %v585 = vsel %vm42, %v577, %v583
    %v587 = vrot.slane %v582, 2
    %v589 = vadd.f32 %v95, %v587
    %v590 = vsel %vm100, %v548, 0
    %592 = vmatpush.msra.mxu0 0.0
    %593 = vmatpush.msra.mxu0 0.0
    %594 = vmatpush.msra.mxu0 0.0
    %595 = vmatpush.msra.mxu0 0.0
    %596 = vmatpush.msra.mxu0 0.0
    %597 = vmatpush.msra.mxu0 0.0
    %598 = vmatpush.msra.mxu0 0.0
    %599 = vmatpush.msra.mxu0 0.0
    %600 = vmatpush.msra.mxu0 0.0
    %601 = vmatpush.msra.mxu0 0.0
    %602 = vmatpush.msra.mxu0 0.0
    %603 = vmatpush.msra.mxu0 0.0
    %604 = vmatpush.msra.mxu0 %v52
    %605 = vmatpush.msra.mxu0 %v51
    %606 = vmatpush.msra.mxu0 %v50
    %607 = vmatpush.msra.mxu0 %v49
    %608 = vmatmul.f32.gmra.mxu0 %v590
    %v609 = vpop.f32.mrf.mxu0
    %v610 = vadd.f32 0.0, %v609
    %611 = vdwg.mxu0
    %v613 = vrot.slane %v610, 2
    %v615 = vadd.f32 %v589, %v613
    %v616 = vtanh.pop %v615
    %v617 = vmul.f32 %v616, 0.5
    %v618 = vadd.f32 %v617, 0.5
    %v619 = vsel %vm45, %v616, %v618
    %v621 = vrot.slane %v525, 7
    %v623 = vmul.f32 %v619, %v621
    %625 = vrot.lane.b32.xlu0 %v619, 64
    %v626 = vpop.permute.xlu0 %625
    %v628 = vmul.f32 %v619, %v626
    %630 = vrot.lane.b32.xlu0 %v628, 32
    %v631 = vpop.permute.xlu0 %630
    %v633 = vadd.f32 %v623, %v631
    %v634 = vtanh.pop %v633
    %636 = vrot.lane.b32.xlu0 %v634, 64
    %v637 = vpop.permute.xlu0 %636
    %v639 = vmul.f32 %v619, %v637
    %v641 = vrot.slane %v585, 2
    %v643 = vadd.f32 %v98, %v641
    %v645 = vrot.slane %v639, 6
    %646 = vrot.lane.b32.xlu0 %v645, 32
    %v647 = vpop.permute.xlu0 %646
    %v648 = vsel %vm100, %v647, 0
    %650 = vmatpush.msra.mxu0 0.0
    %651 = vmatpush.msra.mxu0 0.0
    %652 = vmatpush.msra.mxu0 0.0
    %653 = vmatpush.msra.mxu0 0.0
    %654 = vmatpush.msra.mxu0 0.0
    %655 = vmatpush.msra.mxu0 0.0
    %656 = vmatpush.msra.mxu0 0.0
    %657 = vmatpush.msra.mxu0 0.0
    %658 = vmatpush.msra.mxu0 0.0
    %659 = vmatpush.msra.mxu0 0.0
    %660 = vmatpush.msra.mxu0 0.0
    %661 = vmatpush.msra.mxu0 0.0
    %662 = vmatpush.msra.mxu0 %v52
    %663 = vmatpush.msra.mxu0 %v51
    %664 = vmatpush.msra.mxu0 %v50
    %665 = vmatpush.msra.mxu0 %v49
    %666 = vmatmul.f32.gmra.mxu0 %v648
    %v667 = vpop.f32.mrf.mxu0
    %v668 = vadd.f32 0.0, %v667
    %669 = vdwg.mxu0
    %v671 = vrot.slane %v668, 1
    %v673 = vadd.f32 %v643, %v671
    %v674 = vtanh.pop %v673
    %v675 = vmul.f32 %v674, 0.5
    %v676 = vadd.f32 %v675, 0.5
    %v677 = vsel %vm45, %v674, %v676
    %v679 = vrot.slane %v633, 7
    %v681 = vmul.f32 %v677, %v679
    %683 = vrot.lane.b32.xlu0 %v677, 64
    %v684 = vpop.permute.xlu0 %683
    %v686 = vmul.f32 %v677, %v684
    %688 = vrot.lane.b32.xlu0 %v686, 32
    %v689 = vpop.permute.xlu0 %688
    %v691 = vadd.f32 %v681, %v689
    %v692 = vtanh.pop %v691
    %694 = vrot.lane.b32.xlu0 %v692, 64
    %v695 = vpop.permute.xlu0 %694
    %v697 = vmul.f32 %v677, %v695
    %698 = vrot.lane.b32.xlu0 %v645, 16
    %v699 = vpop.permute.xlu0 %698
    %v702 = vrot.slane %v697, 7
    %703 = vrot.lane.b32.xlu0 %v702, 16
    %v704 = vpop.permute.xlu0 %703
    %v706 = vsel %vm46, %v699, %v704
    %v707 = vsel %vm46, %v704, %v699
    %v709 = vrot.slane %v707, 7
    %v711 = vsel %vm218, %v706, %v709
    %713 = vrot.lane.b32.xlu0 %v702, 32
    %v714 = vpop.permute.xlu0 %713
    %v716 = vsel %vm46, %v647, %v714
    %v717 = vsel %vm46, %v714, %v647
    %v719 = vrot.slane %v717, 7
    %v721 = vsel %vm218, %v716, %v719
    %v723 = vsel %vm220, %v721, 0
    %725 = vmatpush.msra.mxu0 0.0
    %726 = vmatpush.msra.mxu0 0.0
    %727 = vmatpush.msra.mxu0 0.0
    %728 = vmatpush.msra.mxu0 0.0
    %729 = vmatpush.msra.mxu0 0.0
    %730 = vmatpush.msra.mxu0 0.0
    %731 = vmatpush.msra.mxu0 0.0
    %732 = vmatpush.msra.mxu0 0.0
    %733 = vmatpush.msra.mxu0 0.0
    %734 = vmatpush.msra.mxu0 0.0
    %735 = vmatpush.msra.mxu0 0.0
    %736 = vmatpush.msra.mxu0 0.0
    %737 = vmatpush.msra.mxu0 0.0
    %738 = vmatpush.msra.mxu0 0.0
    %739 = vmatpush.msra.mxu0 %v54
    %740 = vmatpush.msra.mxu0 %v53
    %741 = vmatmul.f32.gmra.mxu0 %v723
    %v742 = vpop.f32.mrf.mxu0
    %v743 = vadd.f32 0.0, %v742
    %744 = vdwg.mxu0
    %v746 = vrot.slane %v743, 1
    %v748 = vsel %vm42, %v743, %v746
    %v749 = vrot.slane %v743, 7
    %v751 = vsel %vm42, %v743, %v749
    %v753 = vrot.slane %v90, 1
    %v755 = vsel %vm41, %v90, %v753
    %v756 = vrot.slane %v90, 7
    %v758 = vsel %vm41, %v90, %v756
    %v759 = vadd.f32 %v755, %v748
    %v760 = vsel %vm100, %v714, 0
    %762 = vmatpush.msra.mxu0 0.0
    %763 = vmatpush.msra.mxu0 0.0
    %764 = vmatpush.msra.mxu0 0.0
    %765 = vmatpush.msra.mxu0 0.0
    %766 = vmatpush.msra.mxu0 0.0
    %767 = vmatpush.msra.mxu0 0.0
    %768 = vmatpush.msra.mxu0 0.0
    %769 = vmatpush.msra.mxu0 0.0
    %770 = vmatpush.msra.mxu0 0.0
    %771 = vmatpush.msra.mxu0 0.0
    %772 = vmatpush.msra.mxu0 0.0
    %773 = vmatpush.msra.mxu0 0.0
    %774 = vmatpush.msra.mxu0 %v52
    %775 = vmatpush.msra.mxu0 %v51
    %776 = vmatpush.msra.mxu0 %v50
    %777 = vmatpush.msra.mxu0 %v49
    %778 = vmatmul.f32.gmra.mxu0 %v760
    %v779 = vpop.f32.mrf.mxu0
    %v780 = vadd.f32 0.0, %v779
    %781 = vdwg.mxu0
    %v782 = vadd.f32 %v759, %v780
    %v783 = vtanh.pop %v782
    %v784 = vmul.f32 %v783, 0.5
    %v785 = vadd.f32 %v784, 0.5
    %v786 = vsel %vm45, %v783, %v785
    %v788 = vrot.slane %v691, 7
    %v790 = vmul.f32 %v786, %v788
    %792 = vrot.lane.b32.xlu0 %v786, 64
    %v793 = vpop.permute.xlu0 %792
    %v795 = vmul.f32 %v786, %v793
    %797 = vrot.lane.b32.xlu0 %v795, 32
    %v798 = vpop.permute.xlu0 %797
    %v800 = vadd.f32 %v790, %v798
    %v801 = vtanh.pop %v800
    %803 = vrot.lane.b32.xlu0 %v801, 64
    %v804 = vpop.permute.xlu0 %803
    %v806 = vmul.f32 %v786, %v804
    %v807 = vadd.f32 %v758, %v751
    %809 = vrot.lane.b32.xlu0 %v806, 32
    %v810 = vpop.permute.xlu0 %809
    %v811 = vsel %vm100, %v810, 0
    %813 = vmatpush.msra.mxu0 0.0
    %814 = vmatpush.msra.mxu0 0.0
    %815 = vmatpush.msra.mxu0 0.0
    %816 = vmatpush.msra.mxu0 0.0
    %817 = vmatpush.msra.mxu0 0.0
    %818 = vmatpush.msra.mxu0 0.0
    %819 = vmatpush.msra.mxu0 0.0
    %820 = vmatpush.msra.mxu0 0.0
    %821 = vmatpush.msra.mxu0 0.0
    %822 = vmatpush.msra.mxu0 0.0
    %823 = vmatpush.msra.mxu0 0.0
    %824 = vmatpush.msra.mxu0 0.0
    %825 = vmatpush.msra.mxu0 %v52
    %826 = vmatpush.msra.mxu0 %v51
    %827 = vmatpush.msra.mxu0 %v50
    %828 = vmatpush.msra.mxu0 %v49
    %829 = vmatmul.f32.gmra.mxu0 %v811
    %v830 = vpop.f32.mrf.mxu0
    %v831 = vadd.f32 0.0, %v830
    %832 = vdwg.mxu0
    %v834 = vrot.slane %v831, 7
    %v836 = vadd.f32 %v807, %v834
    %v837 = vtanh.pop %v836
    %v838 = vmul.f32 %v837, 0.5
    %v839 = vadd.f32 %v838, 0.5
    %v840 = vsel %vm45, %v837, %v839
    %v842 = vrot.slane %v800, 7
    %v844 = vmul.f32 %v840, %v842
    %846 = vrot.lane.b32.xlu0 %v840, 64
    %v847 = vpop.permute.xlu0 %846
    %v849 = vmul.f32 %v840, %v847
    %851 = vrot.lane.b32.xlu0 %v849, 32
    %v852 = vpop.permute.xlu0 %851
    %v854 = vadd.f32 %v844, %v852
    %v855 = vtanh.pop %v854
    %857 = vrot.lane.b32.xlu0 %v855, 64
    %v858 = vpop.permute.xlu0 %857
    %v860 = vmul.f32 %v840, %v858
    %861 = vrot.lane.b32.xlu0 %v806, 16
    %v862 = vpop.permute.xlu0 %861
    %v865 = vrot.slane %v860, 1
    %866 = vrot.lane.b32.xlu0 %v865, 16
    %v867 = vpop.permute.xlu0 %866
    %v869 = vsel %vm46, %v862, %v867
    %v870 = vsel %vm46, %v867, %v862
    %v872 = vrot.slane %v870, 7
    %v874 = vsel %vm218, %v869, %v872
    %876 = vrot.lane.b32.xlu0 %v865, 32
    %v877 = vpop.permute.xlu0 %876
    %v879 = vsel %vm46, %v810, %v877
    %v880 = vsel %vm46, %v877, %v810
    %v882 = vrot.slane %v880, 7
    %v884 = vsel %vm218, %v879, %v882
    %v886 = vsel %vm220, %v884, 0
    %888 = vmatpush.msra.mxu0 0.0
    %889 = vmatpush.msra.mxu0 0.0
    %890 = vmatpush.msra.mxu0 0.0
    %891 = vmatpush.msra.mxu0 0.0
    %892 = vmatpush.msra.mxu0 0.0
    %893 = vmatpush.msra.mxu0 0.0
    %894 = vmatpush.msra.mxu0 0.0
    %895 = vmatpush.msra.mxu0 0.0
    %896 = vmatpush.msra.mxu0 0.0
    %897 = vmatpush.msra.mxu0 0.0
    %898 = vmatpush.msra.mxu0 0.0
    %899 = vmatpush.msra.mxu0 0.0
    %900 = vmatpush.msra.mxu0 0.0
    %901 = vmatpush.msra.mxu0 0.0
    %902 = vmatpush.msra.mxu0 %v54
    %903 = vmatpush.msra.mxu0 %v53
    %904 = vmatmul.f32.gmra.mxu0 %v886
    %v905 = vpop.f32.mrf.mxu0
    %v906 = vadd.f32 0.0, %v905
    %907 = vdwg.mxu0
    %v909 = vrot.slane %v906, 1
    %v911 = vsel %vm42, %v906, %v909
    %v912 = vrot.slane %v906, 7
    %v914 = vsel %vm42, %v906, %v912
    %v916 = vrot.slane %v911, 6
    %v918 = vadd.f32 %v755, %v916
    %v919 = vsel %vm100, %v877, 0
    %921 = vmatpush.msra.mxu0 0.0
    %922 = vmatpush.msra.mxu0 0.0
    %923 = vmatpush.msra.mxu0 0.0
    %924 = vmatpush.msra.mxu0 0.0
    %925 = vmatpush.msra.mxu0 0.0
    %926 = vmatpush.msra.mxu0 0.0
    %927 = vmatpush.msra.mxu0 0.0
    %928 = vmatpush.msra.mxu0 0.0
    %929 = vmatpush.msra.mxu0 0.0
    %930 = vmatpush.msra.mxu0 0.0
    %931 = vmatpush.msra.mxu0 0.0
    %932 = vmatpush.msra.mxu0 0.0
    %933 = vmatpush.msra.mxu0 %v52
    %934 = vmatpush.msra.mxu0 %v51
    %935 = vmatpush.msra.mxu0 %v50
    %936 = vmatpush.msra.mxu0 %v49
    %937 = vmatmul.f32.gmra.mxu0 %v919
    %v938 = vpop.f32.mrf.mxu0
    %v939 = vadd.f32 0.0, %v938
    %940 = vdwg.mxu0
    %v942 = vrot.slane %v939, 6
    %v944 = vadd.f32 %v918, %v942
    %v945 = vtanh.pop %v944
    %v946 = vmul.f32 %v945, 0.5
    %v947 = vadd.f32 %v946, 0.5
    %v948 = vsel %vm45, %v945, %v947
    %v950 = vrot.slane %v854, 7
    %v952 = vmul.f32 %v948, %v950
    %954 = vrot.lane.b32.xlu0 %v948, 64
    %v955 = vpop.permute.xlu0 %954
    %v957 = vmul.f32 %v948, %v955
    %959 = vrot.lane.b32.xlu0 %v957, 32
    %v960 = vpop.permute.xlu0 %959
    %v962 = vadd.f32 %v952, %v960
    %v963 = vtanh.pop %v962
    %965 = vrot.lane.b32.xlu0 %v963, 64
    %v966 = vpop.permute.xlu0 %965
    %v968 = vmul.f32 %v948, %v966
    %v970 = vrot.slane %v914, 6
    %v972 = vadd.f32 %v758, %v970
    %v974 = vrot.slane %v968, 2
    %975 = vrot.lane.b32.xlu0 %v974, 32
    %v976 = vpop.permute.xlu0 %975
    %v977 = vsel %vm100, %v976, 0
    %979 = vmatpush.msra.mxu0 0.0
    %980 = vmatpush.msra.mxu0 0.0
    %981 = vmatpush.msra.mxu0 0.0
    %982 = vmatpush.msra.mxu0 0.0
    %983 = vmatpush.msra.mxu0 0.0
    %984 = vmatpush.msra.mxu0 0.0
    %985 = vmatpush.msra.mxu0 0.0
    %986 = vmatpush.msra.mxu0 0.0
    %987 = vmatpush.msra.mxu0 0.0
    %988 = vmatpush.msra.mxu0 0.0
    %989 = vmatpush.msra.mxu0 0.0
    %990 = vmatpush.msra.mxu0 0.0
    %991 = vmatpush.msra.mxu0 %v52
    %992 = vmatpush.msra.mxu0 %v51
    %993 = vmatpush.msra.mxu0 %v50
    %994 = vmatpush.msra.mxu0 %v49
    %995 = vmatmul.f32.gmra.mxu0 %v977
    %v996 = vpop.f32.mrf.mxu0
    %v997 = vadd.f32 0.0, %v996
    %998 = vdwg.mxu0
    %v1000 = vrot.slane %v997, 5
    %v1002 = vadd.f32 %v972, %v1000
    %v1003 = vtanh.pop %v1002
    %v1004 = vmul.f32 %v1003, 0.5
    %v1005 = vadd.f32 %v1004, 0.5
    %v1006 = vsel %vm45, %v1003, %v1005
    %v1008 = vrot.slane %v962, 7
    %v1010 = vmul.f32 %v1006, %v1008
    %1012 = vrot.lane.b32.xlu0 %v1006, 64
    %v1013 = vpop.permute.xlu0 %1012
    %v1015 = vmul.f32 %v1006, %v1013
    %1017 = vrot.lane.b32.xlu0 %v1015, 32
    %v1018 = vpop.permute.xlu0 %1017
    %v1020 = vadd.f32 %v1010, %v1018
    %v1021 = vtanh.pop %v1020
    %1023 = vrot.lane.b32.xlu0 %v1021, 64
    %v1024 = vpop.permute.xlu0 %1023
    %v1026 = vmul.f32 %v1006, %v1024
    %1027 = vrot.lane.b32.xlu0 %v974, 16
    %v1028 = vpop.permute.xlu0 %1027
    %v1031 = vrot.slane %v1026, 3
    %1032 = vrot.lane.b32.xlu0 %v1031, 16
    %v1033 = vpop.permute.xlu0 %1032
    %v1035 = vsel %vm46, %v1028, %v1033
    %v1036 = vsel %vm46, %v1033, %v1028
    %v1038 = vrot.slane %v1036, 7
    %v1040 = vsel %vm218, %v1035, %v1038
    %1042 = vrot.lane.b32.xlu0 %v1031, 32
    %v1043 = vpop.permute.xlu0 %1042
    %v1045 = vsel %vm46, %v976, %v1043
    %v1046 = vsel %vm46, %v1043, %v976
    %v1048 = vrot.slane %v1046, 7
    %v1050 = vsel %vm218, %v1045, %v1048
    %v1052 = vsel %vm220, %v1050, 0
    %1054 = vmatpush.msra.mxu0 0.0
    %1055 = vmatpush.msra.mxu0 0.0
    %1056 = vmatpush.msra.mxu0 0.0
    %1057 = vmatpush.msra.mxu0 0.0
    %1058 = vmatpush.msra.mxu0 0.0
    %1059 = vmatpush.msra.mxu0 0.0
    %1060 = vmatpush.msra.mxu0 0.0
    %1061 = vmatpush.msra.mxu0 0.0
    %1062 = vmatpush.msra.mxu0 0.0
    %1063 = vmatpush.msra.mxu0 0.0
    %1064 = vmatpush.msra.mxu0 0.0
    %1065 = vmatpush.msra.mxu0 0.0
    %1066 = vmatpush.msra.mxu0 0.0
    %1067 = vmatpush.msra.mxu0 0.0
    %1068 = vmatpush.msra.mxu0 %v54
    %1069 = vmatpush.msra.mxu0 %v53
    %1070 = vmatmul.f32.gmra.mxu0 %v1052
    %v1071 = vpop.f32.mrf.mxu0
    %v1072 = vadd.f32 0.0, %v1071
    %1073 = vdwg.mxu0
    %v1075 = vrot.slane %v1072, 1
    %v1077 = vsel %vm42, %v1072, %v1075
    %v1078 = vrot.slane %v1072, 7
    %v1080 = vsel %vm42, %v1072, %v1078
    %v1082 = vrot.slane %v1077, 4
    %v1084 = vadd.f32 %v755, %v1082
    %v1085 = vsel %vm100, %v1043, 0
    %1087 = vmatpush.msra.mxu0 0.0
    %1088 = vmatpush.msra.mxu0 0.0
    %1089 = vmatpush.msra.mxu0 0.0
    %1090 = vmatpush.msra.mxu0 0.0
    %1091 = vmatpush.msra.mxu0 0.0
    %1092 = vmatpush.msra.mxu0 0.0
    %1093 = vmatpush.msra.mxu0 0.0
    %1094 = vmatpush.msra.mxu0 0.0
    %1095 = vmatpush.msra.mxu0 0.0
    %1096 = vmatpush.msra.mxu0 0.0
    %1097 = vmatpush.msra.mxu0 0.0
    %1098 = vmatpush.msra.mxu0 0.0
    %1099 = vmatpush.msra.mxu0 %v52
    %1100 = vmatpush.msra.mxu0 %v51
    %1101 = vmatpush.msra.mxu0 %v50
    %1102 = vmatpush.msra.mxu0 %v49
    %1103 = vmatmul.f32.gmra.mxu0 %v1085
    %v1104 = vpop.f32.mrf.mxu0
    %v1105 = vadd.f32 0.0, %v1104
    %1106 = vdwg.mxu0
    %v1108 = vrot.slane %v1105, 4
    %v1110 = vadd.f32 %v1084, %v1108
    %v1111 = vtanh.pop %v1110
    %v1112 = vmul.f32 %v1111, 0.5
    %v1113 = vadd.f32 %v1112, 0.5
    %v1114 = vsel %vm45, %v1111, %v1113
    %v1116 = vrot.slane %v1020, 7
    %v1118 = vmul.f32 %v1114, %v1116
    %1120 = vrot.lane.b32.xlu0 %v1114, 64
    %v1121 = vpop.permute.xlu0 %1120
    %v1123 = vmul.f32 %v1114, %v1121
    %1125 = vrot.lane.b32.xlu0 %v1123, 32
    %v1126 = vpop.permute.xlu0 %1125
    %v1128 = vadd.f32 %v1118, %v1126
    %v1129 = vtanh.pop %v1128
    %1131 = vrot.lane.b32.xlu0 %v1129, 64
    %v1132 = vpop.permute.xlu0 %1131
    %v1134 = vmul.f32 %v1114, %v1132
    %v1136 = vrot.slane %v1080, 4
    %v1138 = vadd.f32 %v758, %v1136
    %v1140 = vrot.slane %v1134, 4
    %1141 = vrot.lane.b32.xlu0 %v1140, 32
    %v1142 = vpop.permute.xlu0 %1141
    %v1143 = vsel %vm100, %v1142, 0
    %1145 = vmatpush.msra.mxu0 0.0
    %1146 = vmatpush.msra.mxu0 0.0
    %1147 = vmatpush.msra.mxu0 0.0
    %1148 = vmatpush.msra.mxu0 0.0
    %1149 = vmatpush.msra.mxu0 0.0
    %1150 = vmatpush.msra.mxu0 0.0
    %1151 = vmatpush.msra.mxu0 0.0
    %1152 = vmatpush.msra.mxu0 0.0
    %1153 = vmatpush.msra.mxu0 0.0
    %1154 = vmatpush.msra.mxu0 0.0
    %1155 = vmatpush.msra.mxu0 0.0
    %1156 = vmatpush.msra.mxu0 0.0
    %1157 = vmatpush.msra.mxu0 %v52
    %1158 = vmatpush.msra.mxu0 %v51
    %1159 = vmatpush.msra.mxu0 %v50
    %1160 = vmatpush.msra.mxu0 %v49
    %1161 = vmatmul.f32.gmra.mxu0 %v1143
    %v1162 = vpop.f32.mrf.mxu0
    %v1163 = vadd.f32 0.0, %v1162
    %1164 = vdwg.mxu0
    %v1166 = vrot.slane %v1163, 3
    %v1168 = vadd.f32 %v1138, %v1166
    %v1169 = vtanh.pop %v1168
    %v1170 = vmul.f32 %v1169, 0.5
    %v1171 = vadd.f32 %v1170, 0.5
    %v1172 = vsel %vm45, %v1169, %v1171
    %v1174 = vrot.slane %v1128, 7
    %v1176 = vmul.f32 %v1172, %v1174
    %1178 = vrot.lane.b32.xlu0 %v1172, 64
    %v1179 = vpop.permute.xlu0 %1178
    %v1181 = vmul.f32 %v1172, %v1179
    %1183 = vrot.lane.b32.xlu0 %v1181, 32
    %v1184 = vpop.permute.xlu0 %1183
    %v1186 = vadd.f32 %v1176, %v1184
    %v1187 = vtanh.pop %v1186
    %1189 = vrot.lane.b32.xlu0 %v1187, 64
    %v1190 = vpop.permute.xlu0 %1189
    %v1192 = vmul.f32 %v1172, %v1190
    %1193 = vrot.lane.b32.xlu0 %v1140, 16
    %v1194 = vpop.permute.xlu0 %1193
    %v1197 = vrot.slane %v1192, 5
    %1198 = vrot.lane.b32.xlu0 %v1197, 16
    %v1199 = vpop.permute.xlu0 %1198
    %v1201 = vsel %vm46, %v1194, %v1199
    %v1202 = vsel %vm46, %v1199, %v1194
    %v1204 = vrot.slane %v1202, 7
    %v1206 = vsel %vm218, %v1201, %v1204
    %1208 = vrot.lane.b32.xlu0 %v1197, 32
    %v1209 = vpop.permute.xlu0 %1208
    %v1211 = vsel %vm46, %v1142, %v1209
    %v1212 = vsel %vm46, %v1209, %v1142
    %v1214 = vrot.slane %v1212, 7
    %v1216 = vsel %vm218, %v1211, %v1214
    %v1218 = vsel %vm220, %v1216, 0
    %1220 = vmatpush.msra.mxu0 0.0
    %1221 = vmatpush.msra.mxu0 0.0
    %1222 = vmatpush.msra.mxu0 0.0
    %1223 = vmatpush.msra.mxu0 0.0
    %1224 = vmatpush.msra.mxu0 0.0
    %1225 = vmatpush.msra.mxu0 0.0
    %1226 = vmatpush.msra.mxu0 0.0
    %1227 = vmatpush.msra.mxu0 0.0
    %1228 = vmatpush.msra.mxu0 0.0
    %1229 = vmatpush.msra.mxu0 0.0
    %1230 = vmatpush.msra.mxu0 0.0
    %1231 = vmatpush.msra.mxu0 0.0
    %1232 = vmatpush.msra.mxu0 0.0
    %1233 = vmatpush.msra.mxu0 0.0
    %1234 = vmatpush.msra.mxu0 %v54
    %1235 = vmatpush.msra.mxu0 %v53
    %1236 = vmatmul.f32.gmra.mxu0 %v1218
    %v1237 = vpop.f32.mrf.mxu0
    %v1238 = vadd.f32 0.0, %v1237
    %1239 = vdwg.mxu0
    %v1241 = vrot.slane %v1238, 1
    %v1243 = vsel %vm42, %v1238, %v1241
    %v1244 = vrot.slane %v1238, 7
    %v1246 = vsel %vm42, %v1238, %v1244
    %v1248 = vrot.slane %v1243, 2
    %v1250 = vadd.f32 %v755, %v1248
    %v1251 = vsel %vm100, %v1209, 0
    %1253 = vmatpush.msra.mxu0 0.0
    %1254 = vmatpush.msra.mxu0 0.0
    %1255 = vmatpush.msra.mxu0 0.0
    %1256 = vmatpush.msra.mxu0 0.0
    %1257 = vmatpush.msra.mxu0 0.0
    %1258 = vmatpush.msra.mxu0 0.0
    %1259 = vmatpush.msra.mxu0 0.0
    %1260 = vmatpush.msra.mxu0 0.0
    %1261 = vmatpush.msra.mxu0 0.0
    %1262 = vmatpush.msra.mxu0 0.0
    %1263 = vmatpush.msra.mxu0 0.0
    %1264 = vmatpush.msra.mxu0 0.0
    %1265 = vmatpush.msra.mxu0 %v52
    %1266 = vmatpush.msra.mxu0 %v51
    %1267 = vmatpush.msra.mxu0 %v50
    %1268 = vmatpush.msra.mxu0 %v49
    %1269 = vmatmul.f32.gmra.mxu0 %v1251
    %v1270 = vpop.f32.mrf.mxu0
    %v1271 = vadd.f32 0.0, %v1270
    %1272 = vdwg.mxu0
    %v1274 = vrot.slane %v1271, 2
    %v1276 = vadd.f32 %v1250, %v1274
    %v1277 = vtanh.pop %v1276
    %v1278 = vmul.f32 %v1277, 0.5
    %v1279 = vadd.f32 %v1278, 0.5
    %v1280 = vsel %vm45, %v1277, %v1279
    %v1282 = vrot.slane %v1186, 7
    %v1284 = vmul.f32 %v1280, %v1282
    %1286 = vrot.lane.b32.xlu0 %v1280, 64
    %v1287 = vpop.permute.xlu0 %1286
    %v1289 = vmul.f32 %v1280, %v1287
    %1291 = vrot.lane.b32.xlu0 %v1289, 32
    %v1292 = vpop.permute.xlu0 %1291
    %v1294 = vadd.f32 %v1284, %v1292
    %v1295 = vtanh.pop %v1294
    %1297 = vrot.lane.b32.xlu0 %v1295, 64
    %v1298 = vpop.permute.xlu0 %1297
    %v1300 = vmul.f32 %v1280, %v1298
    %v1302 = vrot.slane %v1246, 2
    %v1304 = vadd.f32 %v758, %v1302
    %v1306 = vrot.slane %v1300, 6
    %1307 = vrot.lane.b32.xlu0 %v1306, 32
    %v1308 = vpop.permute.xlu0 %1307
    %v1309 = vsel %vm100, %v1308, 0
    %1311 = vmatpush.msra.mxu0 0.0
    %1312 = vmatpush.msra.mxu0 0.0
    %1313 = vmatpush.msra.mxu0 0.0
    %1314 = vmatpush.msra.mxu0 0.0
    %1315 = vmatpush.msra.mxu0 0.0
    %1316 = vmatpush.msra.mxu0 0.0
    %1317 = vmatpush.msra.mxu0 0.0
    %1318 = vmatpush.msra.mxu0 0.0
    %1319 = vmatpush.msra.mxu0 0.0
    %1320 = vmatpush.msra.mxu0 0.0
    %1321 = vmatpush.msra.mxu0 0.0
    %1322 = vmatpush.msra.mxu0 0.0
    %1323 = vmatpush.msra.mxu0 %v52
    %1324 = vmatpush.msra.mxu0 %v51
    %1325 = vmatpush.msra.mxu0 %v50
    %1326 = vmatpush.msra.mxu0 %v49
    %1327 = vmatmul.f32.gmra.mxu0 %v1309
    %v1328 = vpop.f32.mrf.mxu0
    %v1329 = vadd.f32 0.0, %v1328
    %1330 = vdwg.mxu0
    %v1332 = vrot.slane %v1329, 1
    %v1334 = vadd.f32 %v1304, %v1332
    %v1335 = vtanh.pop %v1334
    %v1336 = vmul.f32 %v1335, 0.5
    %v1337 = vadd.f32 %v1336, 0.5
    %v1338 = vsel %vm45, %v1335, %v1337
    %v1340 = vrot.slane %v1294, 7
    %v1342 = vmul.f32 %v1338, %v1340
    %1344 = vrot.lane.b32.xlu0 %v1338, 64
    %v1345 = vpop.permute.xlu0 %1344
    %v1347 = vmul.f32 %v1338, %v1345
    %1349 = vrot.lane.b32.xlu0 %v1347, 32
    %v1350 = vpop.permute.xlu0 %1349
    %v1352 = vadd.f32 %v1342, %v1350
    %v1353 = vtanh.pop %v1352
    %1355 = vrot.lane.b32.xlu0 %v1353, 64
    %v1356 = vpop.permute.xlu0 %1355
    %v1358 = vmul.f32 %v1338, %v1356
    %1359 = vrot.lane.b32.xlu0 %v1306, 16
    %v1360 = vpop.permute.xlu0 %1359
    %v1363 = vrot.slane %v1358, 7
    %1364 = vrot.lane.b32.xlu0 %v1363, 16
    %v1365 = vpop.permute.xlu0 %1364
    %v1367 = vsel %vm46, %v1360, %v1365
    %v1368 = vsel %vm46, %v1365, %v1360
    %v1370 = vrot.slane %v1368, 7
    %v1372 = vsel %vm218, %v1367, %v1370
    %1374 = vrot.lane.b32.xlu0 %v1363, 32
    %v1375 = vpop.permute.xlu0 %1374
    %v1377 = vsel %vm46, %v1308, %v1375
    %v1378 = vsel %vm46, %v1375, %v1308
    %v1380 = vrot.slane %v1378, 7
    %v1382 = vsel %vm218, %v1377, %v1380
    %v1384 = vsel %vm220, %v1382, 0
    %1386 = vmatpush.msra.mxu0 0.0
    %1387 = vmatpush.msra.mxu0 0.0
    %1388 = vmatpush.msra.mxu0 0.0
    %1389 = vmatpush.msra.mxu0 0.0
    %1390 = vmatpush.msra.mxu0 0.0
    %1391 = vmatpush.msra.mxu0 0.0
    %1392 = vmatpush.msra.mxu0 0.0
    %1393 = vmatpush.msra.mxu0 0.0
    %1394 = vmatpush.msra.mxu0 0.0
    %1395 = vmatpush.msra.mxu0 0.0
    %1396 = vmatpush.msra.mxu0 0.0
    %1397 = vmatpush.msra.mxu0 0.0
    %1398 = vmatpush.msra.mxu0 0.0
    %1399 = vmatpush.msra.mxu0 0.0
    %1400 = vmatpush.msra.mxu0 %v54
    %1401 = vmatpush.msra.mxu0 %v53
    %1402 = vmatmul.f32.gmra.mxu0 %v1384
    %v1403 = vpop.f32.mrf.mxu0
    %v1404 = vadd.f32 0.0, %v1403
    %1405 = vdwg.mxu0
    %v1407 = vrot.slane %v1404, 1
    %v1409 = vsel %vm42, %v1404, %v1407
    %v1410 = vrot.slane %v1404, 7
    %v1412 = vsel %vm42, %v1404, %v1410
    %v1413 = vadd.f32 %v55, %v1409
    %v1414 = vsel %vm100, %v1375, 0
    %1416 = vmatpush.msra.mxu0 0.0
    %1417 = vmatpush.msra.mxu0 0.0
    %1418 = vmatpush.msra.mxu0 0.0
    %1419 = vmatpush.msra.mxu0 0.0
    %1420 = vmatpush.msra.mxu0 0.0
    %1421 = vmatpush.msra.mxu0 0.0
    %1422 = vmatpush.msra.mxu0 0.0
    %1423 = vmatpush.msra.mxu0 0.0
    %1424 = vmatpush.msra.mxu0 0.0
    %1425 = vmatpush.msra.mxu0 0.0
    %1426 = vmatpush.msra.mxu0 0.0
    %1427 = vmatpush.msra.mxu0 0.0
    %1428 = vmatpush.msra.mxu0 %v52
    %1429 = vmatpush.msra.mxu0 %v51
    %1430 = vmatpush.msra.mxu0 %v50
    %1431 = vmatpush.msra.mxu0 %v49
    %1432 = vmatmul.f32.gmra.mxu0 %v1414
    %v1433 = vpop.f32.mrf.mxu0
    %v1434 = vadd.f32 0.0, %v1433
    %1435 = vdwg.mxu0
    %v1436 = vadd.f32 %v1413, %v1434
    %v1437 = vtanh.pop %v1436
    %v1438 = vmul.f32 %v1437, 0.5
    %v1439 = vadd.f32 %v1438, 0.5
    %v1440 = vsel %vm45, %v1437, %v1439
    %v1442 = vrot.slane %v1352, 7
    %v1444 = vmul.f32 %v1440, %v1442
    %1446 = vrot.lane.b32.xlu0 %v1440, 64
    %v1447 = vpop.permute.xlu0 %1446
    %v1449 = vmul.f32 %v1440, %v1447
    %1451 = vrot.lane.b32.xlu0 %v1449, 32
    %v1452 = vpop.permute.xlu0 %1451
    %v1454 = vadd.f32 %v1444, %v1452
    %v1455 = vtanh.pop %v1454
    %1457 = vrot.lane.b32.xlu0 %v1455, 64
    %v1458 = vpop.permute.xlu0 %1457
    %v1460 = vmul.f32 %v1440, %v1458
    %v1462 = vrot.slane %v1412, 1
    %v1464 = vadd.f32 %v55, %v1462
    %1466 = vrot.lane.b32.xlu0 %v1460, 32
    %v1467 = vpop.permute.xlu0 %1466
    %v1468 = vsel %vm100, %v1467, 0
    %1470 = vmatpush.msra.mxu0 0.0
    %1471 = vmatpush.msra.mxu0 0.0
    %1472 = vmatpush.msra.mxu0 0.0
    %1473 = vmatpush.msra.mxu0 0.0
    %1474 = vmatpush.msra.mxu0 0.0
    %1475 = vmatpush.msra.mxu0 0.0
    %1476 = vmatpush.msra.mxu0 0.0
    %1477 = vmatpush.msra.mxu0 0.0
    %1478 = vmatpush.msra.mxu0 0.0
    %1479 = vmatpush.msra.mxu0 0.0
    %1480 = vmatpush.msra.mxu0 0.0
    %1481 = vmatpush.msra.mxu0 0.0
    %1482 = vmatpush.msra.mxu0 %v52
    %1483 = vmatpush.msra.mxu0 %v51
    %1484 = vmatpush.msra.mxu0 %v50
    %1485 = vmatpush.msra.mxu0 %v49
    %1486 = vmatmul.f32.gmra.mxu0 %v1468
    %v1487 = vpop.f32.mrf.mxu0
    %v1488 = vadd.f32 0.0, %v1487
    %1489 = vdwg.mxu0
    %v1490 = vadd.f32 %v1464, %v1488
    %v1491 = vtanh.pop %v1490
    %v1492 = vmul.f32 %v1491, 0.5
    %v1493 = vadd.f32 %v1492, 0.5
    %v1494 = vsel %vm45, %v1491, %v1493
    %v1495 = vmul.f32 %v1494, %v1454
    %1497 = vrot.lane.b32.xlu0 %v1494, 64
    %v1498 = vpop.permute.xlu0 %1497
    %v1500 = vmul.f32 %v1494, %v1498
    %1502 = vrot.lane.b32.xlu0 %v1500, 32
    %v1503 = vpop.permute.xlu0 %1502
    %v1505 = vadd.f32 %v1495, %v1503
    %v1506 = vtanh.pop %v1505
    %1508 = vrot.lane.b32.xlu0 %v1506, 64
    %v1509 = vpop.permute.xlu0 %1508
    %v1511 = vmul.f32 %v1494, %v1509
    %1512 = vrot.lane.b32.xlu0 %v1460, 16
    %v1513 = vpop.permute.xlu0 %1512
    %1516 = vrot.lane.b32.xlu0 %v1511, 16
    %v1517 = vpop.permute.xlu0 %1516
    %v1519 = vsel %vm46, %v1513, %v1517
    %v1520 = vsel %vm46, %v1517, %v1513
    %v1522 = vrot.slane %v1520, 7
    %v1524 = vsel %vm218, %v1519, %v1522
    %v1526 = vrot.slane %v545, 6
    %v1529 = vrot.slane %v711, 4
    %v1532 = vrot.slane %v874, 2
    %v1535 = vrot.slane %v1206, 6
    %v1538 = vrot.slane %v1372, 4
    %v1541 = vrot.slane %v1524, 2
    %vm1543 = vcmask 1041408
    %v1544 = vsel %vm1543, %v379, %v1526
    %vm1545 = vcmask 1043456
    %v1546 = vsel %vm1545, %v1544, %v1529
    %vm1547 = vcmask 1045504
    %v1548 = vsel %vm1547, %v1546, %v1532
    %v1549 = vsel %vm1543, %v1040, %v1535
    %v1550 = vsel %vm1545, %v1549, %v1538
    %v1551 = vsel %vm1547, %v1550, %v1541
    %v1552 = vperm.slane %v58, 0
    %1553 = vxpose.xlu0.b32.start [1/16] %v1548, 128
    %1554 = vxpose.xlu0.b32.cont [2/16] %v1551, 128
    %1555 = vxpose.xlu0.b32.cont [3/16] 0.0, 128
    %1556 = vxpose.xlu0.b32.cont [4/16] 0.0, 128
    %1557 = vxpose.xlu0.b32.cont [5/16] 0.0, 128
    %1558 = vxpose.xlu0.b32.cont [6/16] 0.0, 128
    %1559 = vxpose.xlu0.b32.cont [7/16] 0.0, 128
    %1560 = vxpose.xlu0.b32.cont [8/16] 0.0, 128
    %1561 = vxpose.xlu0.b32.cont [9/16] 0.0, 128
    %1562 = vxpose.xlu0.b32.cont [10/16] 0.0, 128
    %1563 = vxpose.xlu0.b32.cont [11/16] 0.0, 128
    %1564 = vxpose.xlu0.b32.cont [12/16] 0.0, 128
    %1565 = vxpose.xlu0.b32.cont [13/16] 0.0, 128
    %1566 = vxpose.xlu0.b32.cont [14/16] 0.0, 128
    %1567 = vxpose.xlu0.b32.cont [15/16] 0.0, 128
    %1568 = vxpose.xlu0.b32.end [16/16] 0.0, 128
    %v1569 = vpop.trf.xlu0
    %v1570 = vpop.trf.xlu0
    %v1571 = vpop.trf.xlu0
    %v1572 = vpop.trf.xlu0
    %v1573 = vpop.trf.xlu0
    %v1574 = vpop.trf.xlu0
    %v1575 = vpop.trf.xlu0
    %v1576 = vpop.trf.xlu0
    %v1577 = vpop.trf.xlu0
    %v1578 = vpop.trf.xlu0
    %v1579 = vpop.trf.xlu0
    %v1580 = vpop.trf.xlu0
    %v1581 = vpop.trf.xlu0
    %v1582 = vpop.trf.xlu0
    %v1583 = vpop.trf.xlu0
    %v1584 = vpop.trf.xlu0
    %v1586 = vsel %vm220, %v1569, 0
    %v1589 = vsel %vm220, %v1570, 0
    %1591 = vmatpush.msra.mxu0 0.0
    %1592 = vmatpush.msra.mxu0 0.0
    %1593 = vmatpush.msra.mxu0 0.0
    %1594 = vmatpush.msra.mxu0 0.0
    %1595 = vmatpush.msra.mxu0 0.0
    %1596 = vmatpush.msra.mxu0 0.0
    %1597 = vmatpush.msra.mxu0 0.0
    %1598 = vmatpush.msra.mxu0 0.0
    %1599 = vmatpush.msra.mxu0 0.0
    %1600 = vmatpush.msra.mxu0 0.0
    %1601 = vmatpush.msra.mxu0 0.0
    %1602 = vmatpush.msra.mxu0 0.0
    %1603 = vmatpush.msra.mxu0 0.0
    %1604 = vmatpush.msra.mxu0 0.0
    %1605 = vmatpush.msra.mxu0 %v57
    %1606 = vmatpush.msra.mxu0 %v56
    %1607 = vmatmul.f32.gmra.mxu0 %v1586
    %v1608 = vpop.f32.mrf.mxu0
    %v1609 = vadd.f32 %v1552, %v1608
    %1610 = vmatmul.f32.gmra.mxu0 %v1589
    %v1611 = vpop.f32.mrf.mxu0
    %v1612 = vadd.f32 %v1552, %v1611
    %1613 = vdwg.mxu0
    %vm1614 = vcmask 31744
    %1615 = vst.msk [vmem:[%s2] sm:$0xff] %vm1614, %v1609
    %1616 = vst.msk [vmem:[%s2 + $0x8] sm:$0xff] %vm1614, %v1612
    // Predicated region
    $region14: #{tpu_custom_call.1} parent=1 // pred_check
      _
    $region15: #{tpu_custom_call.1} parent=1 // pred_check_branch
      %1618 = sbr.rel (0) target = $region17
    $region16: #{tpu_custom_call.1} parent=1 // pred_region
      _
    $region17: #{tpu_custom_call.1} parent=1 // pred_fallthru
      _
    // Predicated region
    $region18: #{tpu_custom_call.1} parent=1 // pred_check
      _
    $region19: #{tpu_custom_call.1} parent=1 // pred_check_branch
      %1620 = sbr.rel (0) target = $region21
    $region20: #{tpu_custom_call.1} parent=1 // pred_region
      _
    $region21: #{tpu_custom_call.1} parent=1 // pred_fallthru
      _
    %1621 = vsyncpa [#allocation3], 1

</llo_original>
